<compile_context>
chip_gen: v6e
topology: v6e:2x2x1
jax: 0.10.0
libtpu: 0.0.40
codegen_flags: <defaults>
</compile_context>

<pallas_src>
import functools
import math

import jax
import jax.numpy as jnp
from jax.experimental import pallas as pl
from jax.experimental.pallas import tpu as pltpu

# ----------------------------- configuration ------------------------------ #
B, V, C, H, W = 2, 2, 3, 16, 16          # batch, views, channels, spatial
K = 4                                    # num_slots
VIEW_DIM, BCK_DIM, OBJ_DIM = 8, 8, 16    # latent sizes

D_IN   = V * C * H * W                   # 1536 (multiple of 128)
D_VIEW = V * VIEW_DIM                    # 16
D_OBJ  = K * OBJ_DIM                     # 64
D_LAT  = D_VIEW + BCK_DIM + D_OBJ        # 88

LAT_P   = 128                            # lane-aligned latent width
MU_OFF  = 0                              # mu           in lanes [0, 88)   of group 0
LV_OFF  = 128                            # logvar       in lanes [0, 88)   of group 1
LG_OFF  = LV_OFF + D_LAT                 # logits_zeta  in lanes [88, 92)  of group 1
D_ENC_P = 256                            # padded encoder output width (2 groups)
ROWS_P  = 8                              # sublane-padded batch rows

# single lane-dense output slab layout (f32)
ENC_SLAB = 0                             # [0,   256)  encoder output
LAT_SLAB = ENC_SLAB + D_ENC_P            # [256, 384)  latent (padding lanes zeroed)
LP_SLAB  = LAT_SLAB + LAT_P              # [384, 512)  logits_pres (lanes 88..92 valid)
REC_SLAB = LP_SLAB + LAT_P               # [512, 2048) reconstruction
D_OUT_P  = REC_SLAB + D_IN               # 2048 = 16 * 128


# ------------------------------- fused kernel ------------------------------ #
def fused_forward_kernel(x_ref, enc_w_ref, enc_b_ref, dec_w_ref, dec_b_ref,
                         nu_ref, inv_temp_ref, out_ref):
    # ---- encoder: [8, 1536] @ [1536, 256] on the MXU (bf16 in, f32 acc) -----
    # TODO(synk): the real Encoder architecture is unspecified in the reference
    # module; a deterministic linear projection stands in for it here.
    enc = jnp.dot(x_ref[...], enc_w_ref[...],
                  preferred_element_type=jnp.float32) + enc_b_ref[...]
    out_ref[:, ENC_SLAB:ENC_SLAB + D_ENC_P] = enc

    lane = jax.lax.broadcasted_iota(jnp.int32, (ROWS_P, LAT_P), 1)

    noise = nu_ref[:, 0:LAT_P]            # Gaussian noise
    u     = nu_ref[:, LAT_P:2 * LAT_P]    # uniform (0,1) for logistic noise

    mu   = enc[:, MU_OFF:MU_OFF + LAT_P]
    grp2 = enc[:, LV_OFF:LV_OFF + LAT_P]  # logvar in lanes [0,88), logits in [88,92)

    # ---- sample_latent: Gaussian reparameterisation -------------------------
    latent = mu + jnp.exp(0.5 * grp2) * noise
    latent = jnp.where(lane < D_LAT, latent, 0.0)   # zero the padding lanes
    out_ref[:, LAT_SLAB:LAT_SLAB + LAT_P] = latent

    # ---- LogitRelaxedBernoulli rsample ---------------------------------------
    #   logits_pres = (logits + log(u) - log(1 - u)) / temperature
    inv_t = inv_temp_ref[0, 0]
    lp = (grp2 + jnp.log(u) - jnp.log(1.0 - u)) * inv_t
    lp = jnp.where((lane >= D_LAT) & (lane < D_LAT + K), lp, 0.0)
    out_ref[:, LP_SLAB:LP_SLAB + LAT_P] = lp

    # ---- decoder: [8, 128] @ [128, 1536] on the MXU --------------------------
    # TODO(synk): the real Decoder (apc / shp / masks / shadows / occlusion
    # ordering) is unspecified; a deterministic linear reconstruction stands in.
    recon = jnp.dot(latent.astype(jnp.bfloat16), dec_w_ref[...],
                    preferred_element_type=jnp.float32) + dec_b_ref[...]
    out_ref[:, REC_SLAB:REC_SLAB + D_IN] = recon


def fused_forward(params, x_p, nu, inv_temp):
    vmem = pl.BlockSpec(memory_space=pltpu.MemorySpace.VMEM)
    smem = pl.BlockSpec(memory_space=pltpu.MemorySpace.SMEM)
    return pl.pallas_call(
        fused_forward_kernel,
        out_shape=jax.ShapeDtypeStruct((ROWS_P, D_OUT_P), jnp.float32),
        in_specs=[vmem, vmem, vmem, vmem, vmem, vmem, smem],
        out_specs=vmem,
    )(x_p, params["enc_w"], params["enc_b"], params["dec_w"], params["dec_b"],
      nu, inv_temp)


# ------------------------------ parameters ---------------------------------- #
def init_params(key):
    k_ew, k_eb, k_dw, k_db = jax.random.split(key, 4)

    # encoder: lane-aligned output groups [mu | logvar+logits_zeta]
    cols = jnp.arange(D_ENC_P)
    col_valid = (cols < MU_OFF + D_LAT) | ((cols >= LV_OFF) & (cols < LG_OFF + K))
    col_mask = col_valid.astype(jnp.float32)[None, :]
    enc_w = jax.random.normal(k_ew, (D_IN, D_ENC_P), jnp.float32) / math.sqrt(D_IN)
    enc_b = jax.random.normal(k_eb, (1, D_ENC_P), jnp.float32) * 0.01
    enc_w = (enc_w * col_mask).astype(jnp.bfloat16)   # bf16 weights (MXU native)
    enc_b = enc_b * col_mask                          # bias stays f32 (post-MXU add)

    # decoder: zero-mask the padded latent rows (>= D_LAT); combined with the
    # in-kernel latent masking, padding can never leak into the reconstruction.
    row_mask = (jnp.arange(LAT_P) < D_LAT).astype(jnp.float32)[:, None]
    dec_w = jax.random.normal(k_dw, (LAT_P, D_IN), jnp.float32) / math.sqrt(D_LAT)
    dec_w = (dec_w * row_mask).astype(jnp.bfloat16)
    dec_b = jax.random.normal(k_db, (1, D_IN), jnp.float32) * 0.01
    return {"enc_w": enc_w, "enc_b": enc_b, "dec_w": dec_w, "dec_b": dec_b}


# ----------------------------- model forward -------------------------------- #
@functools.partial(jax.jit, static_argnames=("num_slots",))
def model_forward(params, image, temp_pres, temp_shp, noise_scale, noise_min,
                  noise_max, ratio_stick_breaking, num_slots, rng_key):
    # TODO(synk): temp_shp / noise_scale / noise_min / noise_max /
    # ratio_stick_breaking feed the unspecified Decoder (shape relaxation and
    # stick-breaking); they are accepted but unused by the synthetic decoder.
    assert num_slots == K

    x = image.reshape(B, D_IN).astype(jnp.bfloat16)
    x_p = jnp.zeros((ROWS_P, D_IN), jnp.bfloat16).at[:B].set(x)   # sublane pad

    k_noise, k_unif = jax.random.split(rng_key)
    noise = jax.random.normal(k_noise, (ROWS_P, LAT_P), jnp.float32)
    u = jax.random.uniform(k_unif, (ROWS_P, LAT_P), jnp.float32,
                           minval=1e-6, maxval=1.0 - 1e-6)
    nu = jnp.concatenate([noise, u], axis=1)                      # one input DMA
    inv_temp = (1.0 / jnp.asarray(temp_pres, jnp.float32)).reshape(1, 1)

    slab = fused_forward(params, x_p, nu, inv_temp)

    enc_out = slab[:B, ENC_SLAB:ENC_SLAB + D_ENC_P]
    latent  = slab[:B, LAT_SLAB:LAT_SLAB + LAT_P]
    lp_blk  = slab[:B, LP_SLAB:LP_SLAB + LAT_P]
    recon   = slab[:B, REC_SLAB:REC_SLAB + D_IN].reshape(B, V, C, H, W)

    view_mu     = enc_out[:, MU_OFF:MU_OFF + D_VIEW].reshape(B, V, VIEW_DIM)
    bck_mu      = enc_out[:, MU_OFF + D_VIEW:MU_OFF + D_VIEW + BCK_DIM]
    obj_mu      = enc_out[:, MU_OFF + D_VIEW + BCK_DIM:MU_OFF + D_LAT].reshape(B, K, OBJ_DIM)
    view_logvar = enc_out[:, LV_OFF:LV_OFF + D_VIEW].reshape(B, V, VIEW_DIM)
    bck_logvar  = enc_out[:, LV_OFF + D_VIEW:LV_OFF + D_VIEW + BCK_DIM]
    obj_logvar  = enc_out[:, LV_OFF + D_VIEW + BCK_DIM:LV_OFF + D_LAT].reshape(B, K, OBJ_DIM)
    logits_zeta = enc_out[:, LG_OFF:LG_OFF + K].reshape(B, K, 1)

    view_latent = latent[:, 0:D_VIEW].reshape(B, V, VIEW_DIM)
    bck_latent  = latent[:, D_VIEW:D_VIEW + BCK_DIM]
    obj_latent  = latent[:, D_VIEW + BCK_DIM:D_LAT].reshape(B, K, OBJ_DIM)

    logits_pres = lp_blk[:, D_LAT:D_LAT + K].reshape(B, K, 1)
    pres_soft   = jax.nn.sigmoid(logits_pres)                        # relaxed sample
    pres_hard   = (pres_soft[..., 0] >= 0.5).astype(jnp.float32)     # torch.ge(pres, 0.5)

    outputs = {
        "view_mu": view_mu, "view_logvar": view_logvar,
        "bck_mu": bck_mu, "bck_logvar": bck_logvar,
        "obj_mu": obj_mu, "obj_logvar": obj_logvar,
        "logits_zeta": logits_zeta,
        "recon": recon,
        "image": image,
        "pres": pres_hard,            # hard threshold, as in the reference dict
        "pres_soft": pres_soft,       # relaxed (sigmoid) sample fed to decoder
        "logits_pres": logits_pres,
        "view_latent": view_latent,
        "bck_latent": bck_latent,
        "obj_latent": obj_latent,
    }
    return outputs


# --------------------------------- main ------------------------------------- #
if __name__ == "__main__":
    key = jax.random.PRNGKey(0)
    k_img, k_param, k_sample = jax.random.split(key, 3)

    image = jax.random.uniform(k_img, (B, V, C, H, W), jnp.float32,
                               minval=-1.0, maxval=1.0)
    params = init_params(k_param)

    temp_pres = jnp.float32(1.0)
    temp_shp = jnp.float32(1.0)
    noise_scale = jnp.float32(0.01)
    noise_min = jnp.float32(0.0)
    noise_max = jnp.float32(1.0)
    ratio_stick_breaking = jnp.float32(1.0)

    outputs = model_forward(params, image, temp_pres, temp_shp, noise_scale,
                            noise_min, noise_max, ratio_stick_breaking,
                            num_slots=K, rng_key=k_sample)
    outputs = jax.block_until_ready(outputs)

    # light sanity checks
    assert outputs["view_latent"].shape == (B, V, VIEW_DIM)
    assert outputs["bck_latent"].shape == (B, BCK_DIM)
    assert outputs["obj_latent"].shape == (B, K, OBJ_DIM)
    assert outputs["logits_pres"].shape == (B, K, 1)
    assert outputs["pres"].shape == (B, K)
    assert outputs["recon"].shape == (B, V, C, H, W)
    assert bool(jnp.all(jnp.isfinite(outputs["recon"])))
    assert bool(jnp.all(jnp.isfinite(outputs["logits_pres"])))
    assert bool(jnp.all((outputs["pres"] == 0.0) | (outputs["pres"] == 1.0)))
    # reparameterisation consistency: sigmoid(logits_pres) >= 0.5 <=> hard pres
    assert bool(jnp.all((outputs["pres_soft"][..., 0] >= 0.5)
                        == (outputs["pres"] >= 0.5)))

    print("KERNEL_OK")
</pallas_src>

<mosaic_0001>
module attributes {stable_mosaic.version = 11 : i64} {
  func.func @fused_forward_kernel(%arg0: memref<8x1536xbf16, #tpu.memory_space<vmem>>, %arg1: memref<1536x256xbf16, #tpu.memory_space<vmem>>, %arg2: memref<1x256xf32, #tpu.memory_space<vmem>>, %arg3: memref<128x1536xbf16, #tpu.memory_space<vmem>>, %arg4: memref<1x1536xf32, #tpu.memory_space<vmem>>, %arg5: memref<8x256xf32, #tpu.memory_space<vmem>>, %arg6: memref<1x1xf32, #tpu.memory_space<smem>>, %arg7: memref<8x2048xf32, #tpu.memory_space<vmem>>) attributes {dimension_semantics = [], scalar_prefetch = 0 : i64, scratch_operands = 0 : i64, tpu.core_type = #tpu.core_type<tc>} {
    %c0 = arith.constant 0 : index
    %c0_0 = arith.constant 0 : index
    %0 = vector.load %arg0[%c0, %c0_0] : memref<8x1536xbf16, #tpu.memory_space<vmem>>, vector<8x1536xbf16>
    %c0_1 = arith.constant 0 : index
    %c0_2 = arith.constant 0 : index
    %1 = vector.load %arg1[%c0_1, %c0_2] : memref<1536x256xbf16, #tpu.memory_space<vmem>>, vector<1536x256xbf16>
    %cst = arith.constant dense<0.000000e+00> : vector<8x256xf32>
    %2 = tpu.matmul %0, %1, %cst {dimension_numbers = #tpu.dot_dimension_numbers<[1], [0], [0], [1], [0, 0, 1, 1], [], []>} : vector<8x1536xbf16>, vector<1536x256xbf16>, vector<8x256xf32> -> vector<8x256xf32>
    %c0_3 = arith.constant 0 : index
    %c0_4 = arith.constant 0 : index
    %3 = vector.load %arg2[%c0_3, %c0_4] : memref<1x256xf32, #tpu.memory_space<vmem>>, vector<1x256xf32>
    %4 = vector.broadcast %3 : vector<1x256xf32> to vector<8x256xf32>
    %5 = arith.addf %2, %4 : vector<8x256xf32>
    %c0_5 = arith.constant 0 : index
    %c0_6 = arith.constant 0 : index
    %6 = vector.load %arg7[%c0_5, %c0_6] : memref<8x2048xf32, #tpu.memory_space<vmem>>, vector<8x256xf32>
    tpu.vector_store %arg7[%c0_5, %c0_6], %5 {strides = array<i32>} : memref<8x2048xf32, #tpu.memory_space<vmem>>, vector<8x256xf32>,
    %7 = tpu.iota {dimensions = array<i32: 1>} : vector<8x128xi32>
    %c0_7 = arith.constant 0 : index
    %c0_8 = arith.constant 0 : index
    %8 = vector.load %arg5[%c0_7, %c0_8] : memref<8x256xf32, #tpu.memory_space<vmem>>, vector<8x128xf32>
    %c0_9 = arith.constant 0 : index
    %c128 = arith.constant 128 : index
    %9 = vector.load %arg5[%c0_9, %c128] : memref<8x256xf32, #tpu.memory_space<vmem>>, vector<8x128xf32>
    %10 = vector.extract_strided_slice %5 {offsets = [0, 0], sizes = [8, 128], strides = [1, 1]} : vector<8x256xf32> to vector<8x128xf32>
    %11 = vector.extract_strided_slice %5 {offsets = [0, 128], sizes = [8, 128], strides = [1, 1]} : vector<8x256xf32> to vector<8x128xf32>
    %cst_10 = arith.constant 5.000000e-01 : f32
    %12 = vector.broadcast %cst_10 : f32 to vector<8x128xf32>
    %13 = arith.mulf %12, %11 : vector<8x128xf32>
    %14 = math.exp %13 : vector<8x128xf32>
    %15 = arith.mulf %14, %8 : vector<8x128xf32>
    %16 = arith.addf %10, %15 : vector<8x128xf32>
    %c88_i32 = arith.constant 88 : i32
    %17 = vector.broadcast %c88_i32 : i32 to vector<8x128xi32>
    %18 = arith.cmpi slt, %7, %17 : vector<8x128xi32>
    %cst_11 = arith.constant 0.000000e+00 : f32
    %19 = vector.broadcast %cst_11 : f32 to vector<8x128xf32>
    %20 = arith.select %18, %16, %19 : vector<8x128xi1>, vector<8x128xf32>
    %c0_12 = arith.constant 0 : index
    %c256 = arith.constant 256 : index
    %21 = vector.load %arg7[%c0_12, %c256] : memref<8x2048xf32, #tpu.memory_space<vmem>>, vector<8x128xf32>
    tpu.vector_store %arg7[%c0_12, %c256], %20 {strides = array<i32>} : memref<8x2048xf32, #tpu.memory_space<vmem>>, vector<8x128xf32>,
    %c0_13 = arith.constant 0 : index
    %c0_14 = arith.constant 0 : index
    %22 = memref.load %arg6[%c0_13, %c0_14] : memref<1x1xf32, #tpu.memory_space<smem>>
    %23 = math.log %9 : vector<8x128xf32>
    %24 = arith.addf %11, %23 : vector<8x128xf32>
    %cst_15 = arith.constant 1.000000e+00 : f32
    %25 = vector.broadcast %cst_15 : f32 to vector<8x128xf32>
    %26 = arith.subf %25, %9 : vector<8x128xf32>
    %27 = math.log %26 : vector<8x128xf32>
    %28 = arith.subf %24, %27 : vector<8x128xf32>
    %29 = vector.broadcast %22 : f32 to vector<8x128xf32>
    %30 = arith.mulf %28, %29 : vector<8x128xf32>
    %c88_i32_16 = arith.constant 88 : i32
    %31 = vector.broadcast %c88_i32_16 : i32 to vector<8x128xi32>
    %32 = arith.cmpi sge, %7, %31 : vector<8x128xi32>
    %c92_i32 = arith.constant 92 : i32
    %33 = vector.broadcast %c92_i32 : i32 to vector<8x128xi32>
    %34 = arith.cmpi slt, %7, %33 : vector<8x128xi32>
    %35 = arith.andi %32, %34 : vector<8x128xi1>
    %cst_17 = arith.constant 0.000000e+00 : f32
    %36 = vector.broadcast %cst_17 : f32 to vector<8x128xf32>
    %37 = arith.select %35, %30, %36 : vector<8x128xi1>, vector<8x128xf32>
    %c0_18 = arith.constant 0 : index
    %c384 = arith.constant 384 : index
    %38 = vector.load %arg7[%c0_18, %c384] : memref<8x2048xf32, #tpu.memory_space<vmem>>, vector<8x128xf32>
    tpu.vector_store %arg7[%c0_18, %c384], %37 {strides = array<i32>} : memref<8x2048xf32, #tpu.memory_space<vmem>>, vector<8x128xf32>,
    %39 = arith.truncf %20 : vector<8x128xf32> to vector<8x128xbf16>
    %c0_19 = arith.constant 0 : index
    %c0_20 = arith.constant 0 : index
    %40 = vector.load %arg3[%c0_19, %c0_20] : memref<128x1536xbf16, #tpu.memory_space<vmem>>, vector<128x1536xbf16>
    %cst_21 = arith.constant dense<0.000000e+00> : vector<8x1536xf32>
    %41 = tpu.matmul %39, %40, %cst_21 {dimension_numbers = #tpu.dot_dimension_numbers<[1], [0], [0], [1], [0, 0, 1, 1], [], []>} : vector<8x128xbf16>, vector<128x1536xbf16>, vector<8x1536xf32> -> vector<8x1536xf32>
    %c0_22 = arith.constant 0 : index
    %c0_23 = arith.constant 0 : index
    %42 = vector.load %arg4[%c0_22, %c0_23] : memref<1x1536xf32, #tpu.memory_space<vmem>>, vector<1x1536xf32>
    %43 = vector.broadcast %42 : vector<1x1536xf32> to vector<8x1536xf32>
    %44 = arith.addf %41, %43 : vector<8x1536xf32>
    %c0_24 = arith.constant 0 : index
    %c512 = arith.constant 512 : index
    %45 = vector.load %arg7[%c0_24, %c512] : memref<8x2048xf32, #tpu.memory_space<vmem>>, vector<8x1536xf32>
    tpu.vector_store %arg7[%c0_24, %c512], %44 {strides = array<i32>} : memref<8x2048xf32, #tpu.memory_space<vmem>>, vector<8x1536xf32>,
    return
  }
}

</mosaic_0001>

<llo_original>
// kernel: model_forward.3
$region0: #{model_forward.3}
  #allocation0 [shape = 'u32[]', space=smem, size = 0x4, offset = 0x4, fixed_abs, tag = 'smem constant byte address 0x4 - core index']
  #allocation1 [shape = 'u32[144,128]{1,0:T(1,128)}', space=vmem, size = 0x12000, scoped, tag = 'internal scratch']
  #allocation2 [shape = 'f32[1,1]{1,0:T(1,128)S(6)}', space=smem, size = 0x200, scoped, tag = 'scoped memory for model_forward.3']
  %s0 = inlined_call_operand.vmem [shape: bf16[8,1536], index: 0, kind: input, shape index: {}]
  %s1 = inlined_call_operand.hbm [shape: bf16[1536,256], index: 1, kind: input, shape index: {}]
  %s2 = inlined_call_operand.vmem [shape: f32[1,256], index: 2, kind: input, shape index: {}]
  %s3 = inlined_call_operand.hbm [shape: bf16[128,1536], index: 3, kind: input, shape index: {}]
  %s4 = inlined_call_operand.vmem [shape: f32[1,1536], index: 4, kind: input, shape index: {}]
  %s5 = inlined_call_operand.vmem [shape: f32[8,256], index: 5, kind: input, shape index: {}]
  %s6 = inlined_call_operand.<no memory space> [shape: f32[1,1], index: 6, kind: input, shape index: {}]
  %s7 = inlined_call_operand.vmem [shape: f32[8,2048], index: 7, kind: output, shape index: {}]
  %s8 = sld [smem:[#allocation0]]
  $region46: #{model_forward.3} parent=0
    _
  %s10 = ssub.s32 1, %s8
  %s11 = scalar_select 0, %s10, %s8
  %12 = sst [smem:[#allocation2]] %s6
  $region1: #{model_forward.3} parent=0
    #allocation3 [shape = 'u8[786432]{0}', space=vmem, size = 0xc0000, scoped, tag = 'input window, operand 1, single buffered']
    #allocation4 [shape = 's32[1]{0}', space=sflag, size = 0x4, scoped, tag = 'scoped memory for model_forward.3']
    #allocation5 [shape = 'u8[393216]{0}', space=vmem, size = 0x60000, scoped, tag = 'input window, operand 3, single buffered']
    #allocation6 [shape = 's32[1]{0}', space=sflag, size = 0x4, scoped, tag = 'scoped memory for model_forward.3']
    %13 = vsyncpa [#allocation4], 0
    %14 = vsyncpa [#allocation6], 0
    // Predicated region
    $region2: #{model_forward.3} parent=1 // pred_check
      _
    $region3: #{model_forward.3} parent=1 // pred_check_branch
      %16 = sbr.rel (0) target = $region5
    $region4: #{model_forward.3} parent=1 // pred_region
      _
    $region5: #{model_forward.3} parent=1 // pred_fallthru
      _
    // Predicated region
    $region6: #{model_forward.3} parent=1 // pred_check
      _
    $region7: #{model_forward.3} parent=1 // pred_check_branch
      %18 = sbr.rel (0) target = $region9
    $region8: #{model_forward.3} parent=1 // pred_region
      %s20 = ssub.s32 24576, 24576
      %21 = vsyncadd [#allocation4], %s20
      %s22 = sshll.u32 [#allocation3], 4
      %s23 = int_to_ptr.vmem [resolvable:$true] %s22
      %28 = dma.hbm_to_vmem [thread:$0]  %s1, 24576, %s23, [#allocation4], 128, 128, 8
    $region9: #{model_forward.3} parent=1 // pred_fallthru
      _
    // Predicated region
    $region10: #{model_forward.3} parent=1 // pred_check
      _
    $region11: #{model_forward.3} parent=1 // pred_check_branch
      %30 = sbr.rel (0) target = $region13
    $region12: #{model_forward.3} parent=1 // pred_region
      _
    $region13: #{model_forward.3} parent=1 // pred_fallthru
      _
    // Predicated region
    $region14: #{model_forward.3} parent=1 // pred_check
      _
    $region15: #{model_forward.3} parent=1 // pred_check_branch
      %32 = sbr.rel (0) target = $region17
    $region16: #{model_forward.3} parent=1 // pred_region
      %s34 = ssub.s32 12288, 12288
      %35 = vsyncadd [#allocation6], %s34
      %s36 = sshll.u32 [#allocation5], 4
      %s37 = int_to_ptr.vmem [resolvable:$true] %s36
      %42 = dma.hbm_to_vmem [thread:$0]  %s3, 12288, %s37, [#allocation6], 768, 768, 48
    $region17: #{model_forward.3} parent=1 // pred_fallthru
      _
    // Predicated region
    $region18: #{model_forward.3} parent=1 // pred_check
      _
    $region19: #{model_forward.3} parent=1 // pred_check_branch
      %44 = sbr.rel (0) target = $region21
    $region20: #{model_forward.3} parent=1 // pred_region
      _
    $region21: #{model_forward.3} parent=1 // pred_fallthru
      _
    // Predicated region
    $region22: #{model_forward.3} parent=1 // pred_check
      _
    $region23: #{model_forward.3} parent=1 // pred_check_branch
      %46 = sbr.rel (0) target = $region25
    $region24: #{model_forward.3} parent=1 // pred_region
      _
    $region25: #{model_forward.3} parent=1 // pred_fallthru
      _
    // Predicated region
    $region26: #{model_forward.3} parent=1 // pred_check
      _
    $region27: #{model_forward.3} parent=1 // pred_check_branch
      %48 = sbr.rel (0) target = $region29
    $region28: #{model_forward.3} parent=1 // pred_region
      _
    $region29: #{model_forward.3} parent=1 // pred_fallthru
      _
    // Predicated region
    $region30: #{model_forward.3} parent=1 // pred_check
      _
    $region31: #{model_forward.3} parent=1 // pred_check_branch
      %50 = sbr.rel (0) target = $region33
    $region32: #{model_forward.3} parent=1 // pred_region
      %51 = dma.done [#allocation4], 24576
    $region33: #{model_forward.3} parent=1 // pred_fallthru
      _
    // Predicated region
    $region34: #{model_forward.3} parent=1 // pred_check
      _
    $region35: #{model_forward.3} parent=1 // pred_check_branch
      %53 = sbr.rel (0) target = $region37
    $region36: #{model_forward.3} parent=1 // pred_region
      %54 = dma.done [#allocation6], 12288
    $region37: #{model_forward.3} parent=1 // pred_fallthru
      _
    %v56 = vld [vmem:[%s0] sm:$0xff]
    %v57 = vld [vmem:[%s0 + $0x8] sm:$0xff]
    %v58 = vld [vmem:[%s0 + $0x10] sm:$0xff]
    %v59 = vld [vmem:[%s0 + $0x18] sm:$0xff]
    %v60 = vld [vmem:[%s0 + $0x20] sm:$0xff]
    %v61 = vld [vmem:[%s0 + $0x28] sm:$0xff]
    %v62 = vld [vmem:[#allocation3] sm:$0xff]
    %v63 = vld [vmem:[#allocation3 + $0x8] sm:$0xff]
    %v64 = vld [vmem:[#allocation3 + $0x10] sm:$0xff]
    %v65 = vld [vmem:[#allocation3 + $0x18] sm:$0xff]
    %v66 = vld [vmem:[#allocation3 + $0x20] sm:$0xff]
    %v67 = vld [vmem:[#allocation3 + $0x28] sm:$0xff]
    %v68 = vld [vmem:[#allocation3 + $0x30] sm:$0xff]
    %v69 = vld [vmem:[#allocation3 + $0x38] sm:$0xff]
    %v70 = vld [vmem:[#allocation3 + $0x40] sm:$0xff]
    %v71 = vld [vmem:[#allocation3 + $0x48] sm:$0xff]
    %v72 = vld [vmem:[#allocation3 + $0x50] sm:$0xff]
    %v73 = vld [vmem:[#allocation3 + $0x58] sm:$0xff]
    %v74 = vld [vmem:[#allocation3 + $0x60] sm:$0xff]
    %v75 = vld [vmem:[#allocation3 + $0x68] sm:$0xff]
    %v76 = vld [vmem:[#allocation3 + $0x70] sm:$0xff]
    %v77 = vld [vmem:[#allocation3 + $0x78] sm:$0xff]
    %v78 = vld [vmem:[#allocation3 + $0x80] sm:$0xff]
    %v79 = vld [vmem:[#allocation3 + $0x88] sm:$0xff]
    %v80 = vld [vmem:[#allocation3 + $0x90] sm:$0xff]
    %v81 = vld [vmem:[#allocation3 + $0x98] sm:$0xff]
    %v82 = vld [vmem:[#allocation3 + $0xa0] sm:$0xff]
    %v83 = vld [vmem:[#allocation3 + $0xa8] sm:$0xff]
    %v84 = vld [vmem:[#allocation3 + $0xb0] sm:$0xff]
    %v85 = vld [vmem:[#allocation3 + $0xb8] sm:$0xff]
    %v86 = vld [vmem:[#allocation3 + $0xc0] sm:$0xff]
    %v87 = vld [vmem:[#allocation3 + $0xc8] sm:$0xff]
    %v88 = vld [vmem:[#allocation3 + $0xd0] sm:$0xff]
    %v89 = vld [vmem:[#allocation3 + $0xd8] sm:$0xff]
    %v90 = vld [vmem:[#allocation3 + $0xe0] sm:$0xff]
    %v91 = vld [vmem:[#allocation3 + $0xe8] sm:$0xff]
    %v92 = vld [vmem:[#allocation3 + $0xf0] sm:$0xff]
    %v93 = vld [vmem:[#allocation3 + $0xf8] sm:$0xff]
    %v94 = vld [vmem:[#allocation3 + $0x100] sm:$0xff]
    %v95 = vld [vmem:[#allocation3 + $0x108] sm:$0xff]
    %v96 = vld [vmem:[#allocation3 + $0x110] sm:$0xff]
    %v97 = vld [vmem:[#allocation3 + $0x118] sm:$0xff]
    %v98 = vld [vmem:[#allocation3 + $0x120] sm:$0xff]
    %v99 = vld [vmem:[#allocation3 + $0x128] sm:$0xff]
    %v100 = vld [vmem:[#allocation3 + $0x130] sm:$0xff]
    %v101 = vld [vmem:[#allocation3 + $0x138] sm:$0xff]
    %v102 = vld [vmem:[#allocation3 + $0x140] sm:$0xff]
    %v103 = vld [vmem:[#allocation3 + $0x148] sm:$0xff]
    %v104 = vld [vmem:[#allocation3 + $0x150] sm:$0xff]
    %v105 = vld [vmem:[#allocation3 + $0x158] sm:$0xff]
    %v106 = vld [vmem:[#allocation3 + $0x160] sm:$0xff]
    %v107 = vld [vmem:[#allocation3 + $0x168] sm:$0xff]
    %v108 = vld [vmem:[#allocation3 + $0x170] sm:$0xff]
    %v109 = vld [vmem:[#allocation3 + $0x178] sm:$0xff]
    %v110 = vld [vmem:[#allocation3 + $0x180] sm:$0xff]
    %v111 = vld [vmem:[#allocation3 + $0x188] sm:$0xff]
    %v112 = vld [vmem:[#allocation3 + $0x190] sm:$0xff]
    %v113 = vld [vmem:[#allocation3 + $0x198] sm:$0xff]
    %v114 = vld [vmem:[#allocation3 + $0x1a0] sm:$0xff]
    %v115 = vld [vmem:[#allocation3 + $0x1a8] sm:$0xff]
    %v116 = vld [vmem:[#allocation3 + $0x1b0] sm:$0xff]
    %v117 = vld [vmem:[#allocation3 + $0x1b8] sm:$0xff]
    %v118 = vld [vmem:[#allocation3 + $0x1c0] sm:$0xff]
    %v119 = vld [vmem:[#allocation3 + $0x1c8] sm:$0xff]
    %v120 = vld [vmem:[#allocation3 + $0x1d0] sm:$0xff]
    %v121 = vld [vmem:[#allocation3 + $0x1d8] sm:$0xff]
    %v122 = vld [vmem:[#allocation3 + $0x1e0] sm:$0xff]
    %v123 = vld [vmem:[#allocation3 + $0x1e8] sm:$0xff]
    %v124 = vld [vmem:[#allocation3 + $0x1f0] sm:$0xff]
    %v125 = vld [vmem:[#allocation3 + $0x1f8] sm:$0xff]
    %v126 = vld [vmem:[#allocation3 + $0x200] sm:$0xff]
    %v127 = vld [vmem:[#allocation3 + $0x208] sm:$0xff]
    %v128 = vld [vmem:[#allocation3 + $0x210] sm:$0xff]
    %v129 = vld [vmem:[#allocation3 + $0x218] sm:$0xff]
    %v130 = vld [vmem:[#allocation3 + $0x220] sm:$0xff]
    %v131 = vld [vmem:[#allocation3 + $0x228] sm:$0xff]
    %v132 = vld [vmem:[#allocation3 + $0x230] sm:$0xff]
    %v133 = vld [vmem:[#allocation3 + $0x238] sm:$0xff]
    %v134 = vld [vmem:[#allocation3 + $0x240] sm:$0xff]
    %v135 = vld [vmem:[#allocation3 + $0x248] sm:$0xff]
    %v136 = vld [vmem:[#allocation3 + $0x250] sm:$0xff]
    %v137 = vld [vmem:[#allocation3 + $0x258] sm:$0xff]
    %v138 = vld [vmem:[#allocation3 + $0x260] sm:$0xff]
    %v139 = vld [vmem:[#allocation3 + $0x268] sm:$0xff]
    %v140 = vld [vmem:[#allocation3 + $0x270] sm:$0xff]
    %v141 = vld [vmem:[#allocation3 + $0x278] sm:$0xff]
    %v142 = vld [vmem:[#allocation3 + $0x280] sm:$0xff]
    %v143 = vld [vmem:[#allocation3 + $0x288] sm:$0xff]
    %v144 = vld [vmem:[#allocation3 + $0x290] sm:$0xff]
    %v145 = vld [vmem:[#allocation3 + $0x298] sm:$0xff]
    %v146 = vld [vmem:[#allocation3 + $0x2a0] sm:$0xff]
    %v147 = vld [vmem:[#allocation3 + $0x2a8] sm:$0xff]
    %v148 = vld [vmem:[#allocation3 + $0x2b0] sm:$0xff]
    %v149 = vld [vmem:[#allocation3 + $0x2b8] sm:$0xff]
    %v150 = vld [vmem:[#allocation3 + $0x2c0] sm:$0xff]
    %v151 = vld [vmem:[#allocation3 + $0x2c8] sm:$0xff]
    %v152 = vld [vmem:[#allocation3 + $0x2d0] sm:$0xff]
    %v153 = vld [vmem:[#allocation3 + $0x2d8] sm:$0xff]
    %v154 = vld [vmem:[#allocation3 + $0x2e0] sm:$0xff]
    %v155 = vld [vmem:[#allocation3 + $0x2e8] sm:$0xff]
    %v156 = vld [vmem:[#allocation3 + $0x2f0] sm:$0xff]
    %v157 = vld [vmem:[#allocation3 + $0x2f8] sm:$0xff]
    %v158 = vld [vmem:[#allocation3 + $0x300] sm:$0xff]
    %v159 = vld [vmem:[#allocation3 + $0x308] sm:$0xff]
    %v160 = vld [vmem:[#allocation3 + $0x310] sm:$0xff]
    %v161 = vld [vmem:[#allocation3 + $0x318] sm:$0xff]
    %v162 = vld [vmem:[#allocation3 + $0x320] sm:$0xff]
    %v163 = vld [vmem:[#allocation3 + $0x328] sm:$0xff]
    %v164 = vld [vmem:[#allocation3 + $0x330] sm:$0xff]
    %v165 = vld [vmem:[#allocation3 + $0x338] sm:$0xff]
    %v166 = vld [vmem:[#allocation3 + $0x340] sm:$0xff]
    %v167 = vld [vmem:[#allocation3 + $0x348] sm:$0xff]
    %v168 = vld [vmem:[#allocation3 + $0x350] sm:$0xff]
    %v169 = vld [vmem:[#allocation3 + $0x358] sm:$0xff]
    %v170 = vld [vmem:[#allocation3 + $0x360] sm:$0xff]
    %v171 = vld [vmem:[#allocation3 + $0x368] sm:$0xff]
    %v172 = vld [vmem:[#allocation3 + $0x370] sm:$0xff]
    %v173 = vld [vmem:[#allocation3 + $0x378] sm:$0xff]
    %v174 = vld [vmem:[#allocation3 + $0x380] sm:$0xff]
    %v175 = vld [vmem:[#allocation3 + $0x388] sm:$0xff]
    %v176 = vld [vmem:[#allocation3 + $0x390] sm:$0xff]
    %v177 = vld [vmem:[#allocation3 + $0x398] sm:$0xff]
    %v178 = vld [vmem:[#allocation3 + $0x3a0] sm:$0xff]
    %v179 = vld [vmem:[#allocation3 + $0x3a8] sm:$0xff]
    %v180 = vld [vmem:[#allocation3 + $0x3b0] sm:$0xff]
    %v181 = vld [vmem:[#allocation3 + $0x3b8] sm:$0xff]
    %v182 = vld [vmem:[#allocation3 + $0x3c0] sm:$0xff]
    %v183 = vld [vmem:[#allocation3 + $0x3c8] sm:$0xff]
    %v184 = vld [vmem:[#allocation3 + $0x3d0] sm:$0xff]
    %v185 = vld [vmem:[#allocation3 + $0x3d8] sm:$0xff]
    %v186 = vld [vmem:[#allocation3 + $0x3e0] sm:$0xff]
    %v187 = vld [vmem:[#allocation3 + $0x3e8] sm:$0xff]
    %v188 = vld [vmem:[#allocation3 + $0x3f0] sm:$0xff]
    %v189 = vld [vmem:[#allocation3 + $0x3f8] sm:$0xff]
    %v190 = vld [vmem:[#allocation3 + $0x400] sm:$0xff]
    %v191 = vld [vmem:[#allocation3 + $0x408] sm:$0xff]
    %v192 = vld [vmem:[#allocation3 + $0x410] sm:$0xff]
    %v193 = vld [vmem:[#allocation3 + $0x418] sm:$0xff]
    %v194 = vld [vmem:[#allocation3 + $0x420] sm:$0xff]
    %v195 = vld [vmem:[#allocation3 + $0x428] sm:$0xff]
    %v196 = vld [vmem:[#allocation3 + $0x430] sm:$0xff]
    %v197 = vld [vmem:[#allocation3 + $0x438] sm:$0xff]
    %v198 = vld [vmem:[#allocation3 + $0x440] sm:$0xff]
    %v199 = vld [vmem:[#allocation3 + $0x448] sm:$0xff]
    %v200 = vld [vmem:[#allocation3 + $0x450] sm:$0xff]
    %v201 = vld [vmem:[#allocation3 + $0x458] sm:$0xff]
    %v202 = vld [vmem:[#allocation3 + $0x460] sm:$0xff]
    %v203 = vld [vmem:[#allocation3 + $0x468] sm:$0xff]
    %v204 = vld [vmem:[#allocation3 + $0x470] sm:$0xff]
    %v205 = vld [vmem:[#allocation3 + $0x478] sm:$0xff]
    %v206 = vld [vmem:[#allocation3 + $0x480] sm:$0xff]
    %v207 = vld [vmem:[#allocation3 + $0x488] sm:$0xff]
    %v208 = vld [vmem:[#allocation3 + $0x490] sm:$0xff]
    %v209 = vld [vmem:[#allocation3 + $0x498] sm:$0xff]
    %v210 = vld [vmem:[#allocation3 + $0x4a0] sm:$0xff]
    %v211 = vld [vmem:[#allocation3 + $0x4a8] sm:$0xff]
    %v212 = vld [vmem:[#allocation3 + $0x4b0] sm:$0xff]
    %v213 = vld [vmem:[#allocation3 + $0x4b8] sm:$0xff]
    %v214 = vld [vmem:[#allocation3 + $0x4c0] sm:$0xff]
    %v215 = vld [vmem:[#allocation3 + $0x4c8] sm:$0xff]
    %v216 = vld [vmem:[#allocation3 + $0x4d0] sm:$0xff]
    %v217 = vld [vmem:[#allocation3 + $0x4d8] sm:$0xff]
    %v218 = vld [vmem:[#allocation3 + $0x4e0] sm:$0xff]
    %v219 = vld [vmem:[#allocation3 + $0x4e8] sm:$0xff]
    %v220 = vld [vmem:[#allocation3 + $0x4f0] sm:$0xff]
    %v221 = vld [vmem:[#allocation3 + $0x4f8] sm:$0xff]
    %v222 = vld [vmem:[#allocation3 + $0x500] sm:$0xff]
    %v223 = vld [vmem:[#allocation3 + $0x508] sm:$0xff]
    %v224 = vld [vmem:[#allocation3 + $0x510] sm:$0xff]
    %v225 = vld [vmem:[#allocation3 + $0x518] sm:$0xff]
    %v226 = vld [vmem:[#allocation3 + $0x520] sm:$0xff]
    %v227 = vld [vmem:[#allocation3 + $0x528] sm:$0xff]
    %v228 = vld [vmem:[#allocation3 + $0x530] sm:$0xff]
    %v229 = vld [vmem:[#allocation3 + $0x538] sm:$0xff]
    %v230 = vld [vmem:[#allocation3 + $0x540] sm:$0xff]
    %v231 = vld [vmem:[#allocation3 + $0x548] sm:$0xff]
    %v232 = vld [vmem:[#allocation3 + $0x550] sm:$0xff]
    %v233 = vld [vmem:[#allocation3 + $0x558] sm:$0xff]
    %v234 = vld [vmem:[#allocation3 + $0x560] sm:$0xff]
    %v235 = vld [vmem:[#allocation3 + $0x568] sm:$0xff]
    %v236 = vld [vmem:[#allocation3 + $0x570] sm:$0xff]
    %v237 = vld [vmem:[#allocation3 + $0x578] sm:$0xff]
    %v238 = vld [vmem:[#allocation3 + $0x580] sm:$0xff]
    %v239 = vld [vmem:[#allocation3 + $0x588] sm:$0xff]
    %v240 = vld [vmem:[#allocation3 + $0x590] sm:$0xff]
    %v241 = vld [vmem:[#allocation3 + $0x598] sm:$0xff]
    %v242 = vld [vmem:[#allocation3 + $0x5a0] sm:$0xff]
    %v243 = vld [vmem:[#allocation3 + $0x5a8] sm:$0xff]
    %v244 = vld [vmem:[#allocation3 + $0x5b0] sm:$0xff]
    %v245 = vld [vmem:[#allocation3 + $0x5b8] sm:$0xff]
    %v246 = vld [vmem:[#allocation3 + $0x5c0] sm:$0xff]
    %v247 = vld [vmem:[#allocation3 + $0x5c8] sm:$0xff]
    %v248 = vld [vmem:[#allocation3 + $0x5d0] sm:$0xff]
    %v249 = vld [vmem:[#allocation3 + $0x5d8] sm:$0xff]
    %v250 = vld [vmem:[#allocation3 + $0x5e0] sm:$0xff]
    %v251 = vld [vmem:[#allocation3 + $0x5e8] sm:$0xff]
    %v252 = vld [vmem:[#allocation3 + $0x5f0] sm:$0xff]
    %v253 = vld [vmem:[#allocation3 + $0x5f8] sm:$0xff]
    %v254 = vld [vmem:[%s2] sm:$0x3]
    %v256 = vlaneseq
    %v257 = vshrl.u32 %v256, 7
    %v258 = vsub.s32 0, %v257
    %v259 = vrot.slane %v254, %v258
    %v260 = vlaneseq
    %v261 = vshrl.u32 %v260, 7
    %v262 = vsub.s32 1, %v261
    %v263 = vrot.slane %v254, %v262
    %v272 = vunpack.c.l.b16 %v56
    %v273 = vunpack.c.h.b16 %v56
    %v274 = vunpack.c.l.b16 %v57
    %v275 = vunpack.c.h.b16 %v57
    %v276 = vunpack.c.l.b16 %v58
    %v277 = vunpack.c.h.b16 %v58
    %v278 = vunpack.c.l.b16 %v59
    %v279 = vunpack.c.h.b16 %v59
    %v280 = vunpack.c.l.b16 %v60
    %v281 = vunpack.c.h.b16 %v60
    %v282 = vunpack.c.l.b16 %v61
    %v283 = vunpack.c.h.b16 %v61
    %v284 = vpack.c.b16 %v272, %v272
    %v285 = vpack.c.b16 %v273, %v273
    %v286 = vpack.c.b16 %v274, %v274
    %v287 = vpack.c.b16 %v275, %v275
    %v288 = vpack.c.b16 %v276, %v276
    %v289 = vpack.c.b16 %v277, %v277
    %v290 = vpack.c.b16 %v278, %v278
    %v291 = vpack.c.b16 %v279, %v279
    %v292 = vpack.c.b16 %v280, %v280
    %v293 = vpack.c.b16 %v281, %v281
    %v294 = vpack.c.b16 %v282, %v282
    %v295 = vpack.c.b16 %v283, %v283
    %v500 = vunpack.c.l.b16 %v62
    %v501 = vunpack.c.h.b16 %v62
    %v502 = vunpack.c.l.b16 %v63
    %v503 = vunpack.c.h.b16 %v63
    %v504 = vunpack.c.l.b16 %v64
    %v505 = vunpack.c.h.b16 %v64
    %v506 = vunpack.c.l.b16 %v65
    %v507 = vunpack.c.h.b16 %v65
    %v508 = vunpack.c.l.b16 %v66
    %v509 = vunpack.c.h.b16 %v66
    %v510 = vunpack.c.l.b16 %v67
    %v511 = vunpack.c.h.b16 %v67
    %v512 = vunpack.c.l.b16 %v68
    %v513 = vunpack.c.h.b16 %v68
    %v514 = vunpack.c.l.b16 %v69
    %v515 = vunpack.c.h.b16 %v69
    %v516 = vunpack.c.l.b16 %v70
    %v517 = vunpack.c.h.b16 %v70
    %v518 = vunpack.c.l.b16 %v71
    %v519 = vunpack.c.h.b16 %v71
    %v520 = vunpack.c.l.b16 %v72
    %v521 = vunpack.c.h.b16 %v72
    %v522 = vunpack.c.l.b16 %v73
    %v523 = vunpack.c.h.b16 %v73
    %v524 = vunpack.c.l.b16 %v74
    %v525 = vunpack.c.h.b16 %v74
    %v526 = vunpack.c.l.b16 %v75
    %v527 = vunpack.c.h.b16 %v75
    %v528 = vunpack.c.l.b16 %v76
    %v529 = vunpack.c.h.b16 %v76
    %v530 = vunpack.c.l.b16 %v77
    %v531 = vunpack.c.h.b16 %v77
    %v532 = vunpack.c.l.b16 %v78
    %v533 = vunpack.c.h.b16 %v78
    %v534 = vunpack.c.l.b16 %v79
    %v535 = vunpack.c.h.b16 %v79
    %v536 = vunpack.c.l.b16 %v80
    %v537 = vunpack.c.h.b16 %v80
    %v538 = vunpack.c.l.b16 %v81
    %v539 = vunpack.c.h.b16 %v81
    %v540 = vunpack.c.l.b16 %v82
    %v541 = vunpack.c.h.b16 %v82
    %v542 = vunpack.c.l.b16 %v83
    %v543 = vunpack.c.h.b16 %v83
    %v544 = vunpack.c.l.b16 %v84
    %v545 = vunpack.c.h.b16 %v84
    %v546 = vunpack.c.l.b16 %v85
    %v547 = vunpack.c.h.b16 %v85
    %v548 = vunpack.c.l.b16 %v86
    %v549 = vunpack.c.h.b16 %v86
    %v550 = vunpack.c.l.b16 %v87
    %v551 = vunpack.c.h.b16 %v87
    %v552 = vunpack.c.l.b16 %v88
    %v553 = vunpack.c.h.b16 %v88
    %v554 = vunpack.c.l.b16 %v89
    %v555 = vunpack.c.h.b16 %v89
    %v556 = vunpack.c.l.b16 %v90
    %v557 = vunpack.c.h.b16 %v90
    %v558 = vunpack.c.l.b16 %v91
    %v559 = vunpack.c.h.b16 %v91
    %v560 = vunpack.c.l.b16 %v92
    %v561 = vunpack.c.h.b16 %v92
    %v562 = vunpack.c.l.b16 %v93
    %v563 = vunpack.c.h.b16 %v93
    %v564 = vunpack.c.l.b16 %v94
    %v565 = vunpack.c.h.b16 %v94
    %v566 = vunpack.c.l.b16 %v95
    %v567 = vunpack.c.h.b16 %v95
    %v568 = vunpack.c.l.b16 %v96
    %v569 = vunpack.c.h.b16 %v96
    %v570 = vunpack.c.l.b16 %v97
    %v571 = vunpack.c.h.b16 %v97
    %v572 = vunpack.c.l.b16 %v98
    %v573 = vunpack.c.h.b16 %v98
    %v574 = vunpack.c.l.b16 %v99
    %v575 = vunpack.c.h.b16 %v99
    %v576 = vunpack.c.l.b16 %v100
    %v577 = vunpack.c.h.b16 %v100
    %v578 = vunpack.c.l.b16 %v101
    %v579 = vunpack.c.h.b16 %v101
    %v580 = vunpack.c.l.b16 %v102
    %v581 = vunpack.c.h.b16 %v102
    %v582 = vunpack.c.l.b16 %v103
    %v583 = vunpack.c.h.b16 %v103
    %v584 = vunpack.c.l.b16 %v104
    %v585 = vunpack.c.h.b16 %v104
    %v586 = vunpack.c.l.b16 %v105
    %v587 = vunpack.c.h.b16 %v105
    %v588 = vunpack.c.l.b16 %v106
    %v589 = vunpack.c.h.b16 %v106
    %v590 = vunpack.c.l.b16 %v107
    %v591 = vunpack.c.h.b16 %v107
    %v592 = vunpack.c.l.b16 %v108
    %v593 = vunpack.c.h.b16 %v108
    %v594 = vunpack.c.l.b16 %v109
    %v595 = vunpack.c.h.b16 %v109
    %v596 = vunpack.c.l.b16 %v110
    %v597 = vunpack.c.h.b16 %v110
    %v598 = vunpack.c.l.b16 %v111
    %v599 = vunpack.c.h.b16 %v111
    %v600 = vunpack.c.l.b16 %v112
    %v601 = vunpack.c.h.b16 %v112
    %v602 = vunpack.c.l.b16 %v113
    %v603 = vunpack.c.h.b16 %v113
    %v604 = vunpack.c.l.b16 %v114
    %v605 = vunpack.c.h.b16 %v114
    %v606 = vunpack.c.l.b16 %v115
    %v607 = vunpack.c.h.b16 %v115
    %v608 = vunpack.c.l.b16 %v116
    %v609 = vunpack.c.h.b16 %v116
    %v610 = vunpack.c.l.b16 %v117
    %v611 = vunpack.c.h.b16 %v117
    %v612 = vunpack.c.l.b16 %v118
    %v613 = vunpack.c.h.b16 %v118
    %v614 = vunpack.c.l.b16 %v119
    %v615 = vunpack.c.h.b16 %v119
    %v616 = vunpack.c.l.b16 %v120
    %v617 = vunpack.c.h.b16 %v120
    %v618 = vunpack.c.l.b16 %v121
    %v619 = vunpack.c.h.b16 %v121
    %v620 = vunpack.c.l.b16 %v122
    %v621 = vunpack.c.h.b16 %v122
    %v622 = vunpack.c.l.b16 %v123
    %v623 = vunpack.c.h.b16 %v123
    %v624 = vunpack.c.l.b16 %v124
    %v625 = vunpack.c.h.b16 %v124
    %v626 = vunpack.c.l.b16 %v125
    %v627 = vunpack.c.h.b16 %v125
    %v628 = vunpack.c.l.b16 %v126
    %v629 = vunpack.c.h.b16 %v126
    %v630 = vunpack.c.l.b16 %v127
    %v631 = vunpack.c.h.b16 %v127
    %v632 = vunpack.c.l.b16 %v128
    %v633 = vunpack.c.h.b16 %v128
    %v634 = vunpack.c.l.b16 %v129
    %v635 = vunpack.c.h.b16 %v129
    %v636 = vunpack.c.l.b16 %v130
    %v637 = vunpack.c.h.b16 %v130
    %v638 = vunpack.c.l.b16 %v131
    %v639 = vunpack.c.h.b16 %v131
    %v640 = vunpack.c.l.b16 %v132
    %v641 = vunpack.c.h.b16 %v132
    %v642 = vunpack.c.l.b16 %v133
    %v643 = vunpack.c.h.b16 %v133
    %v644 = vunpack.c.l.b16 %v134
    %v645 = vunpack.c.h.b16 %v134
    %v646 = vunpack.c.l.b16 %v135
    %v647 = vunpack.c.h.b16 %v135
    %v648 = vunpack.c.l.b16 %v136
    %v649 = vunpack.c.h.b16 %v136
    %v650 = vunpack.c.l.b16 %v137
    %v651 = vunpack.c.h.b16 %v137
    %v652 = vunpack.c.l.b16 %v138
    %v653 = vunpack.c.h.b16 %v138
    %v654 = vunpack.c.l.b16 %v139
    %v655 = vunpack.c.h.b16 %v139
    %v656 = vunpack.c.l.b16 %v140
    %v657 = vunpack.c.h.b16 %v140
    %v658 = vunpack.c.l.b16 %v141
    %v659 = vunpack.c.h.b16 %v141
    %v660 = vunpack.c.l.b16 %v142
    %v661 = vunpack.c.h.b16 %v142
    %v662 = vunpack.c.l.b16 %v143
    %v663 = vunpack.c.h.b16 %v143
    %v664 = vunpack.c.l.b16 %v144
    %v665 = vunpack.c.h.b16 %v144
    %v666 = vunpack.c.l.b16 %v145
    %v667 = vunpack.c.h.b16 %v145
    %v668 = vunpack.c.l.b16 %v146
    %v669 = vunpack.c.h.b16 %v146
    %v670 = vunpack.c.l.b16 %v147
    %v671 = vunpack.c.h.b16 %v147
    %v672 = vunpack.c.l.b16 %v148
    %v673 = vunpack.c.h.b16 %v148
    %v674 = vunpack.c.l.b16 %v149
    %v675 = vunpack.c.h.b16 %v149
    %v676 = vunpack.c.l.b16 %v150
    %v677 = vunpack.c.h.b16 %v150
    %v678 = vunpack.c.l.b16 %v151
    %v679 = vunpack.c.h.b16 %v151
    %v680 = vunpack.c.l.b16 %v152
    %v681 = vunpack.c.h.b16 %v152
    %v682 = vunpack.c.l.b16 %v153
    %v683 = vunpack.c.h.b16 %v153
    %v684 = vunpack.c.l.b16 %v154
    %v685 = vunpack.c.h.b16 %v154
    %v686 = vunpack.c.l.b16 %v155
    %v687 = vunpack.c.h.b16 %v155
    %v688 = vunpack.c.l.b16 %v156
    %v689 = vunpack.c.h.b16 %v156
    %v690 = vunpack.c.l.b16 %v157
    %v691 = vunpack.c.h.b16 %v157
    %v692 = vunpack.c.l.b16 %v158
    %v693 = vunpack.c.h.b16 %v158
    %v694 = vunpack.c.l.b16 %v159
    %v695 = vunpack.c.h.b16 %v159
    %v696 = vunpack.c.l.b16 %v160
    %v697 = vunpack.c.h.b16 %v160
    %v698 = vunpack.c.l.b16 %v161
    %v699 = vunpack.c.h.b16 %v161
    %v700 = vunpack.c.l.b16 %v162
    %v701 = vunpack.c.h.b16 %v162
    %v702 = vunpack.c.l.b16 %v163
    %v703 = vunpack.c.h.b16 %v163
    %v704 = vunpack.c.l.b16 %v164
    %v705 = vunpack.c.h.b16 %v164
    %v706 = vunpack.c.l.b16 %v165
    %v707 = vunpack.c.h.b16 %v165
    %v708 = vunpack.c.l.b16 %v166
    %v709 = vunpack.c.h.b16 %v166
    %v710 = vunpack.c.l.b16 %v167
    %v711 = vunpack.c.h.b16 %v167
    %v712 = vunpack.c.l.b16 %v168
    %v713 = vunpack.c.h.b16 %v168
    %v714 = vunpack.c.l.b16 %v169
    %v715 = vunpack.c.h.b16 %v169
    %v716 = vunpack.c.l.b16 %v170
    %v717 = vunpack.c.h.b16 %v170
    %v718 = vunpack.c.l.b16 %v171
    %v719 = vunpack.c.h.b16 %v171
    %v720 = vunpack.c.l.b16 %v172
    %v721 = vunpack.c.h.b16 %v172
    %v722 = vunpack.c.l.b16 %v173
    %v723 = vunpack.c.h.b16 %v173
    %v724 = vunpack.c.l.b16 %v174
    %v725 = vunpack.c.h.b16 %v174
    %v726 = vunpack.c.l.b16 %v175
    %v727 = vunpack.c.h.b16 %v175
    %v728 = vunpack.c.l.b16 %v176
    %v729 = vunpack.c.h.b16 %v176
    %v730 = vunpack.c.l.b16 %v177
    %v731 = vunpack.c.h.b16 %v177
    %v732 = vunpack.c.l.b16 %v178
    %v733 = vunpack.c.h.b16 %v178
    %v734 = vunpack.c.l.b16 %v179
    %v735 = vunpack.c.h.b16 %v179
    %v736 = vunpack.c.l.b16 %v180
    %v737 = vunpack.c.h.b16 %v180
    %v738 = vunpack.c.l.b16 %v181
    %v739 = vunpack.c.h.b16 %v181
    %v740 = vunpack.c.l.b16 %v182
    %v741 = vunpack.c.h.b16 %v182
    %v742 = vunpack.c.l.b16 %v183
    %v743 = vunpack.c.h.b16 %v183
    %v744 = vunpack.c.l.b16 %v184
    %v745 = vunpack.c.h.b16 %v184
    %v746 = vunpack.c.l.b16 %v185
    %v747 = vunpack.c.h.b16 %v185
    %v748 = vunpack.c.l.b16 %v186
    %v749 = vunpack.c.h.b16 %v186
    %v750 = vunpack.c.l.b16 %v187
    %v751 = vunpack.c.h.b16 %v187
    %v752 = vunpack.c.l.b16 %v188
    %v753 = vunpack.c.h.b16 %v188
    %v754 = vunpack.c.l.b16 %v189
    %v755 = vunpack.c.h.b16 %v189
    %v756 = vunpack.c.l.b16 %v190
    %v757 = vunpack.c.h.b16 %v190
    %v758 = vunpack.c.l.b16 %v191
    %v759 = vunpack.c.h.b16 %v191
    %v760 = vunpack.c.l.b16 %v192
    %v761 = vunpack.c.h.b16 %v192
    %v762 = vunpack.c.l.b16 %v193
    %v763 = vunpack.c.h.b16 %v193
    %v764 = vunpack.c.l.b16 %v194
    %v765 = vunpack.c.h.b16 %v194
    %v766 = vunpack.c.l.b16 %v195
    %v767 = vunpack.c.h.b16 %v195
    %v768 = vunpack.c.l.b16 %v196
    %v769 = vunpack.c.h.b16 %v196
    %v770 = vunpack.c.l.b16 %v197
    %v771 = vunpack.c.h.b16 %v197
    %v772 = vunpack.c.l.b16 %v198
    %v773 = vunpack.c.h.b16 %v198
    %v774 = vunpack.c.l.b16 %v199
    %v775 = vunpack.c.h.b16 %v199
    %v776 = vunpack.c.l.b16 %v200
    %v777 = vunpack.c.h.b16 %v200
    %v778 = vunpack.c.l.b16 %v201
    %v779 = vunpack.c.h.b16 %v201
    %v780 = vunpack.c.l.b16 %v202
    %v781 = vunpack.c.h.b16 %v202
    %v782 = vunpack.c.l.b16 %v203
    %v783 = vunpack.c.h.b16 %v203
    %v784 = vunpack.c.l.b16 %v204
    %v785 = vunpack.c.h.b16 %v204
    %v786 = vunpack.c.l.b16 %v205
    %v787 = vunpack.c.h.b16 %v205
    %v788 = vunpack.c.l.b16 %v206
    %v789 = vunpack.c.h.b16 %v206
    %v790 = vunpack.c.l.b16 %v207
    %v791 = vunpack.c.h.b16 %v207
    %v792 = vunpack.c.l.b16 %v208
    %v793 = vunpack.c.h.b16 %v208
    %v794 = vunpack.c.l.b16 %v209
    %v795 = vunpack.c.h.b16 %v209
    %v796 = vunpack.c.l.b16 %v210
    %v797 = vunpack.c.h.b16 %v210
    %v798 = vunpack.c.l.b16 %v211
    %v799 = vunpack.c.h.b16 %v211
    %v800 = vunpack.c.l.b16 %v212
    %v801 = vunpack.c.h.b16 %v212
    %v802 = vunpack.c.l.b16 %v213
    %v803 = vunpack.c.h.b16 %v213
    %v804 = vunpack.c.l.b16 %v214
    %v805 = vunpack.c.h.b16 %v214
    %v806 = vunpack.c.l.b16 %v215
    %v807 = vunpack.c.h.b16 %v215
    %v808 = vunpack.c.l.b16 %v216
    %v809 = vunpack.c.h.b16 %v216
    %v810 = vunpack.c.l.b16 %v217
    %v811 = vunpack.c.h.b16 %v217
    %v812 = vunpack.c.l.b16 %v218
    %v813 = vunpack.c.h.b16 %v218
    %v814 = vunpack.c.l.b16 %v219
    %v815 = vunpack.c.h.b16 %v219
    %v816 = vunpack.c.l.b16 %v220
    %v817 = vunpack.c.h.b16 %v220
    %v818 = vunpack.c.l.b16 %v221
    %v819 = vunpack.c.h.b16 %v221
    %v820 = vunpack.c.l.b16 %v222
    %v821 = vunpack.c.h.b16 %v222
    %v822 = vunpack.c.l.b16 %v223
    %v823 = vunpack.c.h.b16 %v223
    %v824 = vunpack.c.l.b16 %v224
    %v825 = vunpack.c.h.b16 %v224
    %v826 = vunpack.c.l.b16 %v225
    %v827 = vunpack.c.h.b16 %v225
    %v828 = vunpack.c.l.b16 %v226
    %v829 = vunpack.c.h.b16 %v226
    %v830 = vunpack.c.l.b16 %v227
    %v831 = vunpack.c.h.b16 %v227
    %v832 = vunpack.c.l.b16 %v228
    %v833 = vunpack.c.h.b16 %v228
    %v834 = vunpack.c.l.b16 %v229
    %v835 = vunpack.c.h.b16 %v229
    %v836 = vunpack.c.l.b16 %v230
    %v837 = vunpack.c.h.b16 %v230
    %v838 = vunpack.c.l.b16 %v231
    %v839 = vunpack.c.h.b16 %v231
    %v840 = vunpack.c.l.b16 %v232
    %v841 = vunpack.c.h.b16 %v232
    %v842 = vunpack.c.l.b16 %v233
    %v843 = vunpack.c.h.b16 %v233
    %v844 = vunpack.c.l.b16 %v234
    %v845 = vunpack.c.h.b16 %v234
    %v846 = vunpack.c.l.b16 %v235
    %v847 = vunpack.c.h.b16 %v235
    %v848 = vunpack.c.l.b16 %v236
    %v849 = vunpack.c.h.b16 %v236
    %v850 = vunpack.c.l.b16 %v237
    %v851 = vunpack.c.h.b16 %v237
    %v852 = vunpack.c.l.b16 %v238
    %v853 = vunpack.c.h.b16 %v238
    %v854 = vunpack.c.l.b16 %v239
    %v855 = vunpack.c.h.b16 %v239
    %v856 = vunpack.c.l.b16 %v240
    %v857 = vunpack.c.h.b16 %v240
    %v858 = vunpack.c.l.b16 %v241
    %v859 = vunpack.c.h.b16 %v241
    %v860 = vunpack.c.l.b16 %v242
    %v861 = vunpack.c.h.b16 %v242
    %v862 = vunpack.c.l.b16 %v243
    %v863 = vunpack.c.h.b16 %v243
    %v864 = vunpack.c.l.b16 %v244
    %v865 = vunpack.c.h.b16 %v244
    %v866 = vunpack.c.l.b16 %v245
    %v867 = vunpack.c.h.b16 %v245
    %v868 = vunpack.c.l.b16 %v246
    %v869 = vunpack.c.h.b16 %v246
    %v870 = vunpack.c.l.b16 %v247
    %v871 = vunpack.c.h.b16 %v247
    %v872 = vunpack.c.l.b16 %v248
    %v873 = vunpack.c.h.b16 %v248
    %v874 = vunpack.c.l.b16 %v249
    %v875 = vunpack.c.h.b16 %v249
    %v876 = vunpack.c.l.b16 %v250
    %v877 = vunpack.c.h.b16 %v250
    %v878 = vunpack.c.l.b16 %v251
    %v879 = vunpack.c.h.b16 %v251
    %v880 = vunpack.c.l.b16 %v252
    %v881 = vunpack.c.h.b16 %v252
    %v882 = vunpack.c.l.b16 %v253
    %v883 = vunpack.c.h.b16 %v253
    %v884 = vpack.c.b16 %v502, %v500
    %v885 = vpack.c.b16 %v503, %v501
    %v886 = vpack.c.b16 %v506, %v504
    %v887 = vpack.c.b16 %v507, %v505
    %v888 = vpack.c.b16 %v510, %v508
    %v889 = vpack.c.b16 %v511, %v509
    %v890 = vpack.c.b16 %v514, %v512
    %v891 = vpack.c.b16 %v515, %v513
    %v892 = vpack.c.b16 %v518, %v516
    %v893 = vpack.c.b16 %v519, %v517
    %v894 = vpack.c.b16 %v522, %v520
    %v895 = vpack.c.b16 %v523, %v521
    %v896 = vpack.c.b16 %v526, %v524
    %v897 = vpack.c.b16 %v527, %v525
    %v898 = vpack.c.b16 %v530, %v528
    %v899 = vpack.c.b16 %v531, %v529
    %v900 = vpack.c.b16 %v534, %v532
    %v901 = vpack.c.b16 %v535, %v533
    %v902 = vpack.c.b16 %v538, %v536
    %v903 = vpack.c.b16 %v539, %v537
    %v904 = vpack.c.b16 %v542, %v540
    %v905 = vpack.c.b16 %v543, %v541
    %v906 = vpack.c.b16 %v546, %v544
    %v907 = vpack.c.b16 %v547, %v545
    %v908 = vpack.c.b16 %v550, %v548
    %v909 = vpack.c.b16 %v551, %v549
    %v910 = vpack.c.b16 %v554, %v552
    %v911 = vpack.c.b16 %v555, %v553
    %v912 = vpack.c.b16 %v558, %v556
    %v913 = vpack.c.b16 %v559, %v557
    %v914 = vpack.c.b16 %v562, %v560
    %v915 = vpack.c.b16 %v563, %v561
    %v916 = vpack.c.b16 %v566, %v564
    %v917 = vpack.c.b16 %v567, %v565
    %v918 = vpack.c.b16 %v570, %v568
    %v919 = vpack.c.b16 %v571, %v569
    %v920 = vpack.c.b16 %v574, %v572
    %v921 = vpack.c.b16 %v575, %v573
    %v922 = vpack.c.b16 %v578, %v576
    %v923 = vpack.c.b16 %v579, %v577
    %v924 = vpack.c.b16 %v582, %v580
    %v925 = vpack.c.b16 %v583, %v581
    %v926 = vpack.c.b16 %v586, %v584
    %v927 = vpack.c.b16 %v587, %v585
    %v928 = vpack.c.b16 %v590, %v588
    %v929 = vpack.c.b16 %v591, %v589
    %v930 = vpack.c.b16 %v594, %v592
    %v931 = vpack.c.b16 %v595, %v593
    %v932 = vpack.c.b16 %v598, %v596
    %v933 = vpack.c.b16 %v599, %v597
    %v934 = vpack.c.b16 %v602, %v600
    %v935 = vpack.c.b16 %v603, %v601
    %v936 = vpack.c.b16 %v606, %v604
    %v937 = vpack.c.b16 %v607, %v605
    %v938 = vpack.c.b16 %v610, %v608
    %v939 = vpack.c.b16 %v611, %v609
    %v940 = vpack.c.b16 %v614, %v612
    %v941 = vpack.c.b16 %v615, %v613
    %v942 = vpack.c.b16 %v618, %v616
    %v943 = vpack.c.b16 %v619, %v617
    %v944 = vpack.c.b16 %v622, %v620
    %v945 = vpack.c.b16 %v623, %v621
    %v946 = vpack.c.b16 %v626, %v624
    %v947 = vpack.c.b16 %v627, %v625
    %v948 = vpack.c.b16 %v630, %v628
    %v949 = vpack.c.b16 %v631, %v629
    %v950 = vpack.c.b16 %v634, %v632
    %v951 = vpack.c.b16 %v635, %v633
    %v952 = vpack.c.b16 %v638, %v636
    %v953 = vpack.c.b16 %v639, %v637
    %v954 = vpack.c.b16 %v642, %v640
    %v955 = vpack.c.b16 %v643, %v641
    %v956 = vpack.c.b16 %v646, %v644
    %v957 = vpack.c.b16 %v647, %v645
    %v958 = vpack.c.b16 %v650, %v648
    %v959 = vpack.c.b16 %v651, %v649
    %v960 = vpack.c.b16 %v654, %v652
    %v961 = vpack.c.b16 %v655, %v653
    %v962 = vpack.c.b16 %v658, %v656
    %v963 = vpack.c.b16 %v659, %v657
    %v964 = vpack.c.b16 %v662, %v660
    %v965 = vpack.c.b16 %v663, %v661
    %v966 = vpack.c.b16 %v666, %v664
    %v967 = vpack.c.b16 %v667, %v665
    %v968 = vpack.c.b16 %v670, %v668
    %v969 = vpack.c.b16 %v671, %v669
    %v970 = vpack.c.b16 %v674, %v672
    %v971 = vpack.c.b16 %v675, %v673
    %v972 = vpack.c.b16 %v678, %v676
    %v973 = vpack.c.b16 %v679, %v677
    %v974 = vpack.c.b16 %v682, %v680
    %v975 = vpack.c.b16 %v683, %v681
    %v976 = vpack.c.b16 %v686, %v684
    %v977 = vpack.c.b16 %v687, %v685
    %v978 = vpack.c.b16 %v690, %v688
    %v979 = vpack.c.b16 %v691, %v689
    %v980 = vpack.c.b16 %v694, %v692
    %v981 = vpack.c.b16 %v695, %v693
    %v982 = vpack.c.b16 %v698, %v696
    %v983 = vpack.c.b16 %v699, %v697
    %v984 = vpack.c.b16 %v702, %v700
    %v985 = vpack.c.b16 %v703, %v701
    %v986 = vpack.c.b16 %v706, %v704
    %v987 = vpack.c.b16 %v707, %v705
    %v988 = vpack.c.b16 %v710, %v708
    %v989 = vpack.c.b16 %v711, %v709
    %v990 = vpack.c.b16 %v714, %v712
    %v991 = vpack.c.b16 %v715, %v713
    %v992 = vpack.c.b16 %v718, %v716
    %v993 = vpack.c.b16 %v719, %v717
    %v994 = vpack.c.b16 %v722, %v720
    %v995 = vpack.c.b16 %v723, %v721
    %v996 = vpack.c.b16 %v726, %v724
    %v997 = vpack.c.b16 %v727, %v725
    %v998 = vpack.c.b16 %v730, %v728
    %v999 = vpack.c.b16 %v731, %v729
    %v1000 = vpack.c.b16 %v734, %v732
    %v1001 = vpack.c.b16 %v735, %v733
    %v1002 = vpack.c.b16 %v738, %v736
    %v1003 = vpack.c.b16 %v739, %v737
    %v1004 = vpack.c.b16 %v742, %v740
    %v1005 = vpack.c.b16 %v743, %v741
    %v1006 = vpack.c.b16 %v746, %v744
    %v1007 = vpack.c.b16 %v747, %v745
    %v1008 = vpack.c.b16 %v750, %v748
    %v1009 = vpack.c.b16 %v751, %v749
    %v1010 = vpack.c.b16 %v754, %v752
    %v1011 = vpack.c.b16 %v755, %v753
    %v1012 = vpack.c.b16 %v758, %v756
    %v1013 = vpack.c.b16 %v759, %v757
    %v1014 = vpack.c.b16 %v762, %v760
    %v1015 = vpack.c.b16 %v763, %v761
    %v1016 = vpack.c.b16 %v766, %v764
    %v1017 = vpack.c.b16 %v767, %v765
    %v1018 = vpack.c.b16 %v770, %v768
    %v1019 = vpack.c.b16 %v771, %v769
    %v1020 = vpack.c.b16 %v774, %v772
    %v1021 = vpack.c.b16 %v775, %v773
    %v1022 = vpack.c.b16 %v778, %v776
    %v1023 = vpack.c.b16 %v779, %v777
    %v1024 = vpack.c.b16 %v782, %v780
    %v1025 = vpack.c.b16 %v783, %v781
    %v1026 = vpack.c.b16 %v786, %v784
    %v1027 = vpack.c.b16 %v787, %v785
    %v1028 = vpack.c.b16 %v790, %v788
    %v1029 = vpack.c.b16 %v791, %v789
    %v1030 = vpack.c.b16 %v794, %v792
    %v1031 = vpack.c.b16 %v795, %v793
    %v1032 = vpack.c.b16 %v798, %v796
    %v1033 = vpack.c.b16 %v799, %v797
    %v1034 = vpack.c.b16 %v802, %v800
    %v1035 = vpack.c.b16 %v803, %v801
    %v1036 = vpack.c.b16 %v806, %v804
    %v1037 = vpack.c.b16 %v807, %v805
    %v1038 = vpack.c.b16 %v810, %v808
    %v1039 = vpack.c.b16 %v811, %v809
    %v1040 = vpack.c.b16 %v814, %v812
    %v1041 = vpack.c.b16 %v815, %v813
    %v1042 = vpack.c.b16 %v818, %v816
    %v1043 = vpack.c.b16 %v819, %v817
    %v1044 = vpack.c.b16 %v822, %v820
    %v1045 = vpack.c.b16 %v823, %v821
    %v1046 = vpack.c.b16 %v826, %v824
    %v1047 = vpack.c.b16 %v827, %v825
    %v1048 = vpack.c.b16 %v830, %v828
    %v1049 = vpack.c.b16 %v831, %v829
    %v1050 = vpack.c.b16 %v834, %v832
    %v1051 = vpack.c.b16 %v835, %v833
    %v1052 = vpack.c.b16 %v838, %v836
    %v1053 = vpack.c.b16 %v839, %v837
    %v1054 = vpack.c.b16 %v842, %v840
    %v1055 = vpack.c.b16 %v843, %v841
    %v1056 = vpack.c.b16 %v846, %v844
    %v1057 = vpack.c.b16 %v847, %v845
    %v1058 = vpack.c.b16 %v850, %v848
    %v1059 = vpack.c.b16 %v851, %v849
    %v1060 = vpack.c.b16 %v854, %v852
    %v1061 = vpack.c.b16 %v855, %v853
    %v1062 = vpack.c.b16 %v858, %v856
    %v1063 = vpack.c.b16 %v859, %v857
    %v1064 = vpack.c.b16 %v862, %v860
    %v1065 = vpack.c.b16 %v863, %v861
    %v1066 = vpack.c.b16 %v866, %v864
    %v1067 = vpack.c.b16 %v867, %v865
    %v1068 = vpack.c.b16 %v870, %v868
    %v1069 = vpack.c.b16 %v871, %v869
    %v1070 = vpack.c.b16 %v874, %v872
    %v1071 = vpack.c.b16 %v875, %v873
    %v1072 = vpack.c.b16 %v878, %v876
    %v1073 = vpack.c.b16 %v879, %v877
    %v1074 = vpack.c.b16 %v882, %v880
    %v1075 = vpack.c.b16 %v883, %v881
    %1268 = vmatprep.subr.bf16.mxu0 %v899
    %1269 = vmatpush1.bf16.msra.mxu0 %v898
    %1270 = vmatprep.subr.bf16.mxu0 %v897
    %1271 = vmatpush1.bf16.msra.mxu0 %v896
    %1272 = vmatprep.subr.bf16.mxu0 %v895
    %1273 = vmatpush1.bf16.msra.mxu0 %v894
    %1274 = vmatprep.subr.bf16.mxu0 %v893
    %1275 = vmatpush1.bf16.msra.mxu0 %v892
    %1276 = vmatprep.subr.bf16.mxu0 %v891
    %1277 = vmatpush1.bf16.msra.mxu0 %v890
    %1278 = vmatprep.subr.bf16.mxu0 %v889
    %1279 = vmatpush1.bf16.msra.mxu0 %v888
    %1280 = vmatprep.subr.bf16.mxu0 %v887
    %1281 = vmatpush1.bf16.msra.mxu0 %v886
    %1282 = vmatprep.subr.bf16.mxu0 %v885
    %1283 = vmatpush1.bf16.msra.mxu0 %v884
    %1284 = vmatprep.subr.bf16.mxu0 %v915
    %1285 = vmatpush2.bf16.msra.mxu0 %v914
    %1286 = vmatprep.subr.bf16.mxu0 %v913
    %1287 = vmatpush2.bf16.msra.mxu0 %v912
    %1288 = vmatprep.subr.bf16.mxu0 %v911
    %1289 = vmatpush2.bf16.msra.mxu0 %v910
    %1290 = vmatprep.subr.bf16.mxu0 %v909
    %1291 = vmatpush2.bf16.msra.mxu0 %v908
    %1292 = vmatprep.subr.bf16.mxu0 %v907
    %1293 = vmatpush2.bf16.msra.mxu0 %v906
    %1294 = vmatprep.subr.bf16.mxu0 %v905
    %1295 = vmatpush2.bf16.msra.mxu0 %v904
    %1296 = vmatprep.subr.bf16.mxu0 %v903
    %1297 = vmatpush2.bf16.msra.mxu0 %v902
    %1298 = vmatprep.subr.bf16.mxu0 %v901
    %1299 = vmatpush2.bf16.msra.mxu0 %v900
    %1300 = vmatprep.mubr.bf16.mxu0 %v285
    %1301 = vmatmul.mubr.bf16.gmra.mxu0 %v284
    %v1302 = vpop.f32.mrf.mxu0
    %v1303 = vadd.f32 %v259, %v1302
    %v1304 = vpop.f32.mrf.mxu0
    %v1305 = vadd.f32 %v263, %v1304
    %v1306 = vpop.f32.mrf.mxu0
    %v1307 = vpop.f32.mrf.mxu0
    %1308 = vdwg.mxu0
    %1309 = vmatprep.subr.bf16.mxu0 %v931
    %1310 = vmatpush1.bf16.msra.mxu0 %v930
    %1311 = vmatprep.subr.bf16.mxu0 %v929
    %1312 = vmatpush1.bf16.msra.mxu0 %v928
    %1313 = vmatprep.subr.bf16.mxu0 %v927
    %1314 = vmatpush1.bf16.msra.mxu0 %v926
    %1315 = vmatprep.subr.bf16.mxu0 %v925
    %1316 = vmatpush1.bf16.msra.mxu0 %v924
    %1317 = vmatprep.subr.bf16.mxu0 %v923
    %1318 = vmatpush1.bf16.msra.mxu0 %v922
    %1319 = vmatprep.subr.bf16.mxu0 %v921
    %1320 = vmatpush1.bf16.msra.mxu0 %v920
    %1321 = vmatprep.subr.bf16.mxu0 %v919
    %1322 = vmatpush1.bf16.msra.mxu0 %v918
    %1323 = vmatprep.subr.bf16.mxu0 %v917
    %1324 = vmatpush1.bf16.msra.mxu0 %v916
    %1325 = vmatprep.subr.bf16.mxu0 %v947
    %1326 = vmatpush2.bf16.msra.mxu0 %v946
    %1327 = vmatprep.subr.bf16.mxu0 %v945
    %1328 = vmatpush2.bf16.msra.mxu0 %v944
    %1329 = vmatprep.subr.bf16.mxu0 %v943
    %1330 = vmatpush2.bf16.msra.mxu0 %v942
    %1331 = vmatprep.subr.bf16.mxu0 %v941
    %1332 = vmatpush2.bf16.msra.mxu0 %v940
    %1333 = vmatprep.subr.bf16.mxu0 %v939
    %1334 = vmatpush2.bf16.msra.mxu0 %v938
    %1335 = vmatprep.subr.bf16.mxu0 %v937
    %1336 = vmatpush2.bf16.msra.mxu0 %v936
    %1337 = vmatprep.subr.bf16.mxu0 %v935
    %1338 = vmatpush2.bf16.msra.mxu0 %v934
    %1339 = vmatprep.subr.bf16.mxu0 %v933
    %1340 = vmatpush2.bf16.msra.mxu0 %v932
    %1341 = vmatprep.mubr.bf16.mxu0 %v287
    %1342 = vmatmul.mubr.bf16.gmra.mxu0 %v286
    %v1343 = vpop.f32.mrf.mxu0
    %v1344 = vadd.f32 %v1303, %v1343
    %v1345 = vpop.f32.mrf.mxu0
    %v1346 = vadd.f32 %v1305, %v1345
    %v1347 = vpop.f32.mrf.mxu0
    %v1348 = vpop.f32.mrf.mxu0
    %1349 = vdwg.mxu0
    %1350 = vmatprep.subr.bf16.mxu0 %v963
    %1351 = vmatpush1.bf16.msra.mxu0 %v962
    %1352 = vmatprep.subr.bf16.mxu0 %v961
    %1353 = vmatpush1.bf16.msra.mxu0 %v960
    %1354 = vmatprep.subr.bf16.mxu0 %v959
    %1355 = vmatpush1.bf16.msra.mxu0 %v958
    %1356 = vmatprep.subr.bf16.mxu0 %v957
    %1357 = vmatpush1.bf16.msra.mxu0 %v956
    %1358 = vmatprep.subr.bf16.mxu0 %v955
    %1359 = vmatpush1.bf16.msra.mxu0 %v954
    %1360 = vmatprep.subr.bf16.mxu0 %v953
    %1361 = vmatpush1.bf16.msra.mxu0 %v952
    %1362 = vmatprep.subr.bf16.mxu0 %v951
    %1363 = vmatpush1.bf16.msra.mxu0 %v950
    %1364 = vmatprep.subr.bf16.mxu0 %v949
    %1365 = vmatpush1.bf16.msra.mxu0 %v948
    %1366 = vmatprep.subr.bf16.mxu0 %v979
    %1367 = vmatpush2.bf16.msra.mxu0 %v978
    %1368 = vmatprep.subr.bf16.mxu0 %v977
    %1369 = vmatpush2.bf16.msra.mxu0 %v976
    %1370 = vmatprep.subr.bf16.mxu0 %v975
    %1371 = vmatpush2.bf16.msra.mxu0 %v974
    %1372 = vmatprep.subr.bf16.mxu0 %v973
    %1373 = vmatpush2.bf16.msra.mxu0 %v972
    %1374 = vmatprep.subr.bf16.mxu0 %v971
    %1375 = vmatpush2.bf16.msra.mxu0 %v970
    %1376 = vmatprep.subr.bf16.mxu0 %v969
    %1377 = vmatpush2.bf16.msra.mxu0 %v968
    %1378 = vmatprep.subr.bf16.mxu0 %v967
    %1379 = vmatpush2.bf16.msra.mxu0 %v966
    %1380 = vmatprep.subr.bf16.mxu0 %v965
    %1381 = vmatpush2.bf16.msra.mxu0 %v964
    %1382 = vmatprep.mubr.bf16.mxu0 %v289
    %1383 = vmatmul.mubr.bf16.gmra.mxu0 %v288
    %v1384 = vpop.f32.mrf.mxu0
    %v1385 = vadd.f32 %v1344, %v1384
    %v1386 = vpop.f32.mrf.mxu0
    %v1387 = vadd.f32 %v1346, %v1386
    %v1388 = vpop.f32.mrf.mxu0
    %v1389 = vpop.f32.mrf.mxu0
    %1390 = vdwg.mxu0
    %1391 = vmatprep.subr.bf16.mxu0 %v995
    %1392 = vmatpush1.bf16.msra.mxu0 %v994
    %1393 = vmatprep.subr.bf16.mxu0 %v993
    %1394 = vmatpush1.bf16.msra.mxu0 %v992
    %1395 = vmatprep.subr.bf16.mxu0 %v991
    %1396 = vmatpush1.bf16.msra.mxu0 %v990
    %1397 = vmatprep.subr.bf16.mxu0 %v989
    %1398 = vmatpush1.bf16.msra.mxu0 %v988
    %1399 = vmatprep.subr.bf16.mxu0 %v987
    %1400 = vmatpush1.bf16.msra.mxu0 %v986
    %1401 = vmatprep.subr.bf16.mxu0 %v985
    %1402 = vmatpush1.bf16.msra.mxu0 %v984
    %1403 = vmatprep.subr.bf16.mxu0 %v983
    %1404 = vmatpush1.bf16.msra.mxu0 %v982
    %1405 = vmatprep.subr.bf16.mxu0 %v981
    %1406 = vmatpush1.bf16.msra.mxu0 %v980
    %1407 = vmatprep.subr.bf16.mxu0 %v1011
    %1408 = vmatpush2.bf16.msra.mxu0 %v1010
    %1409 = vmatprep.subr.bf16.mxu0 %v1009
    %1410 = vmatpush2.bf16.msra.mxu0 %v1008
    %1411 = vmatprep.subr.bf16.mxu0 %v1007
    %1412 = vmatpush2.bf16.msra.mxu0 %v1006
    %1413 = vmatprep.subr.bf16.mxu0 %v1005
    %1414 = vmatpush2.bf16.msra.mxu0 %v1004
    %1415 = vmatprep.subr.bf16.mxu0 %v1003
    %1416 = vmatpush2.bf16.msra.mxu0 %v1002
    %1417 = vmatprep.subr.bf16.mxu0 %v1001
    %1418 = vmatpush2.bf16.msra.mxu0 %v1000
    %1419 = vmatprep.subr.bf16.mxu0 %v999
    %1420 = vmatpush2.bf16.msra.mxu0 %v998
    %1421 = vmatprep.subr.bf16.mxu0 %v997
    %1422 = vmatpush2.bf16.msra.mxu0 %v996
    %1423 = vmatprep.mubr.bf16.mxu0 %v291
    %1424 = vmatmul.mubr.bf16.gmra.mxu0 %v290
    %v1425 = vpop.f32.mrf.mxu0
    %v1426 = vadd.f32 %v1385, %v1425
    %v1427 = vpop.f32.mrf.mxu0
    %v1428 = vadd.f32 %v1387, %v1427
    %v1429 = vpop.f32.mrf.mxu0
    %v1430 = vpop.f32.mrf.mxu0
    %1431 = vdwg.mxu0
    %1432 = vmatprep.subr.bf16.mxu0 %v1027
    %1433 = vmatpush1.bf16.msra.mxu0 %v1026
    %1434 = vmatprep.subr.bf16.mxu0 %v1025
    %1435 = vmatpush1.bf16.msra.mxu0 %v1024
    %1436 = vmatprep.subr.bf16.mxu0 %v1023
    %1437 = vmatpush1.bf16.msra.mxu0 %v1022
    %1438 = vmatprep.subr.bf16.mxu0 %v1021
    %1439 = vmatpush1.bf16.msra.mxu0 %v1020
    %1440 = vmatprep.subr.bf16.mxu0 %v1019
    %1441 = vmatpush1.bf16.msra.mxu0 %v1018
    %1442 = vmatprep.subr.bf16.mxu0 %v1017
    %1443 = vmatpush1.bf16.msra.mxu0 %v1016
    %1444 = vmatprep.subr.bf16.mxu0 %v1015
    %1445 = vmatpush1.bf16.msra.mxu0 %v1014
    %1446 = vmatprep.subr.bf16.mxu0 %v1013
    %1447 = vmatpush1.bf16.msra.mxu0 %v1012
    %1448 = vmatprep.subr.bf16.mxu0 %v1043
    %1449 = vmatpush2.bf16.msra.mxu0 %v1042
    %1450 = vmatprep.subr.bf16.mxu0 %v1041
    %1451 = vmatpush2.bf16.msra.mxu0 %v1040
    %1452 = vmatprep.subr.bf16.mxu0 %v1039
    %1453 = vmatpush2.bf16.msra.mxu0 %v1038
    %1454 = vmatprep.subr.bf16.mxu0 %v1037
    %1455 = vmatpush2.bf16.msra.mxu0 %v1036
    %1456 = vmatprep.subr.bf16.mxu0 %v1035
    %1457 = vmatpush2.bf16.msra.mxu0 %v1034
    %1458 = vmatprep.subr.bf16.mxu0 %v1033
    %1459 = vmatpush2.bf16.msra.mxu0 %v1032
    %1460 = vmatprep.subr.bf16.mxu0 %v1031
    %1461 = vmatpush2.bf16.msra.mxu0 %v1030
    %1462 = vmatprep.subr.bf16.mxu0 %v1029
    %1463 = vmatpush2.bf16.msra.mxu0 %v1028
    %1464 = vmatprep.mubr.bf16.mxu0 %v293
    %1465 = vmatmul.mubr.bf16.gmra.mxu0 %v292
    %v1466 = vpop.f32.mrf.mxu0
    %v1467 = vadd.f32 %v1426, %v1466
    %v1468 = vpop.f32.mrf.mxu0
    %v1469 = vadd.f32 %v1428, %v1468
    %v1470 = vpop.f32.mrf.mxu0
    %v1471 = vpop.f32.mrf.mxu0
    %1472 = vdwg.mxu0
    %1473 = vmatprep.subr.bf16.mxu0 %v1059
    %1474 = vmatpush1.bf16.msra.mxu0 %v1058
    %1475 = vmatprep.subr.bf16.mxu0 %v1057
    %1476 = vmatpush1.bf16.msra.mxu0 %v1056
    %1477 = vmatprep.subr.bf16.mxu0 %v1055
    %1478 = vmatpush1.bf16.msra.mxu0 %v1054
    %1479 = vmatprep.subr.bf16.mxu0 %v1053
    %1480 = vmatpush1.bf16.msra.mxu0 %v1052
    %1481 = vmatprep.subr.bf16.mxu0 %v1051
    %1482 = vmatpush1.bf16.msra.mxu0 %v1050
    %1483 = vmatprep.subr.bf16.mxu0 %v1049
    %1484 = vmatpush1.bf16.msra.mxu0 %v1048
    %1485 = vmatprep.subr.bf16.mxu0 %v1047
    %1486 = vmatpush1.bf16.msra.mxu0 %v1046
    %1487 = vmatprep.subr.bf16.mxu0 %v1045
    %1488 = vmatpush1.bf16.msra.mxu0 %v1044
    %1489 = vmatprep.subr.bf16.mxu0 %v1075
    %1490 = vmatpush2.bf16.msra.mxu0 %v1074
    %1491 = vmatprep.subr.bf16.mxu0 %v1073
    %1492 = vmatpush2.bf16.msra.mxu0 %v1072
    %1493 = vmatprep.subr.bf16.mxu0 %v1071
    %1494 = vmatpush2.bf16.msra.mxu0 %v1070
    %1495 = vmatprep.subr.bf16.mxu0 %v1069
    %1496 = vmatpush2.bf16.msra.mxu0 %v1068
    %1497 = vmatprep.subr.bf16.mxu0 %v1067
    %1498 = vmatpush2.bf16.msra.mxu0 %v1066
    %1499 = vmatprep.subr.bf16.mxu0 %v1065
    %1500 = vmatpush2.bf16.msra.mxu0 %v1064
    %1501 = vmatprep.subr.bf16.mxu0 %v1063
    %1502 = vmatpush2.bf16.msra.mxu0 %v1062
    %1503 = vmatprep.subr.bf16.mxu0 %v1061
    %1504 = vmatpush2.bf16.msra.mxu0 %v1060
    %1505 = vmatprep.mubr.bf16.mxu0 %v295
    %1506 = vmatmul.mubr.bf16.gmra.mxu0 %v294
    %v1507 = vpop.f32.mrf.mxu0
    %v1508 = vadd.f32 %v1467, %v1507
    %v1509 = vpop.f32.mrf.mxu0
    %v1510 = vadd.f32 %v1469, %v1509
    %v1511 = vpop.f32.mrf.mxu0
    %v1512 = vpop.f32.mrf.mxu0
    %1513 = vdwg.mxu0
    %1514 = vst [vmem:[%s7] sm:$0xff] %v1508
    %1515 = vst [vmem:[%s7 + $0x8] sm:$0xff] %v1510
    %v1516 = vlaneseq
    %v1517 = vand.u32 %v1516, 127
    %v1518 = vld [vmem:[%s5] sm:$0xff]
    %v1519 = vld [vmem:[%s5 + $0x8] sm:$0xff]
    %v1520 = vmul.f32 %v1510, 0.5
    %v1521 = vmul.f32 %v1520, 1.442695
    %v1522 = vpow.pop %v1521
    %v1523 = vmul.f32 %v1522, %v1518
    %v1524 = vadd.f32 %v1508, %v1523
    %vm1525 = vcmp.lt.s32.totalorder %v1517, 88
    %v1526 = vsel %vm1525, %v1524, 0.0
    %1527 = vst [vmem:[%s7 + $0x10] sm:$0xff] %v1526
    %s1528 = sld [smem:[#allocation2]]
    %v1529 = vlog2.pop %v1519
    %v1530 = vmul.f32 %v1529, 0.6931472
    %v1531 = vadd.f32 %v1510, %v1530
    %v1532 = vsub.f32 1.0, %v1519
    %v1533 = vlog2.pop %v1532
    %v1534 = vmul.f32 %v1533, 0.6931472
    %v1535 = vsub.f32 %v1531, %v1534
    %v1536 = vstv %s1528
    %v1537 = vmul.f32 %v1535, %v1536
    %vm1538 = vcmp.ge.s32.totalorder %v1517, 88
    %vm1539 = vcmp.lt.s32.totalorder %v1517, 92
    %vm1540 = vmand %vm1538, %vm1539
    %v1541 = vsel %vm1540, %v1537, 0.0
    %1542 = vst [vmem:[%s7 + $0x18] sm:$0xff] %v1541
    %v1543 = vpack.c.bf16 %v1526, %v1526
    %v1544 = vld [vmem:[#allocation5] sm:$0xff]
    %v1545 = vld [vmem:[#allocation5 + $0x8] sm:$0xff]
    %v1546 = vld [vmem:[#allocation5 + $0x10] sm:$0xff]
    %v1547 = vld [vmem:[#allocation5 + $0x18] sm:$0xff]
    %v1548 = vld [vmem:[#allocation5 + $0x20] sm:$0xff]
    %v1549 = vld [vmem:[#allocation5 + $0x28] sm:$0xff]
    %v1550 = vld [vmem:[#allocation5 + $0x30] sm:$0xff]
    %v1551 = vld [vmem:[#allocation5 + $0x38] sm:$0xff]
    %v1552 = vld [vmem:[#allocation5 + $0x40] sm:$0xff]
    %v1553 = vld [vmem:[#allocation5 + $0x48] sm:$0xff]
    %v1554 = vld [vmem:[#allocation5 + $0x50] sm:$0xff]
    %v1555 = vld [vmem:[#allocation5 + $0x58] sm:$0xff]
    %v1556 = vld [vmem:[#allocation5 + $0x60] sm:$0xff]
    %v1557 = vld [vmem:[#allocation5 + $0x68] sm:$0xff]
    %v1558 = vld [vmem:[#allocation5 + $0x70] sm:$0xff]
    %v1559 = vld [vmem:[#allocation5 + $0x78] sm:$0xff]
    %v1560 = vld [vmem:[#allocation5 + $0x80] sm:$0xff]
    %v1561 = vld [vmem:[#allocation5 + $0x88] sm:$0xff]
    %v1562 = vld [vmem:[#allocation5 + $0x90] sm:$0xff]
    %v1563 = vld [vmem:[#allocation5 + $0x98] sm:$0xff]
    %v1564 = vld [vmem:[#allocation5 + $0xa0] sm:$0xff]
    %v1565 = vld [vmem:[#allocation5 + $0xa8] sm:$0xff]
    %v1566 = vld [vmem:[#allocation5 + $0xb0] sm:$0xff]
    %v1567 = vld [vmem:[#allocation5 + $0xb8] sm:$0xff]
    %v1568 = vld [vmem:[#allocation5 + $0xc0] sm:$0xff]
    %v1569 = vld [vmem:[#allocation5 + $0xc8] sm:$0xff]
    %v1570 = vld [vmem:[#allocation5 + $0xd0] sm:$0xff]
    %v1571 = vld [vmem:[#allocation5 + $0xd8] sm:$0xff]
    %v1572 = vld [vmem:[#allocation5 + $0xe0] sm:$0xff]
    %v1573 = vld [vmem:[#allocation5 + $0xe8] sm:$0xff]
    %v1574 = vld [vmem:[#allocation5 + $0xf0] sm:$0xff]
    %v1575 = vld [vmem:[#allocation5 + $0xf8] sm:$0xff]
    %v1576 = vld [vmem:[#allocation5 + $0x100] sm:$0xff]
    %v1577 = vld [vmem:[#allocation5 + $0x108] sm:$0xff]
    %v1578 = vld [vmem:[#allocation5 + $0x110] sm:$0xff]
    %v1579 = vld [vmem:[#allocation5 + $0x118] sm:$0xff]
    %v1580 = vld [vmem:[#allocation5 + $0x120] sm:$0xff]
    %v1581 = vld [vmem:[#allocation5 + $0x128] sm:$0xff]
    %v1582 = vld [vmem:[#allocation5 + $0x130] sm:$0xff]
    %v1583 = vld [vmem:[#allocation5 + $0x138] sm:$0xff]
    %v1584 = vld [vmem:[#allocation5 + $0x140] sm:$0xff]
    %v1585 = vld [vmem:[#allocation5 + $0x148] sm:$0xff]
    %v1586 = vld [vmem:[#allocation5 + $0x150] sm:$0xff]
    %v1587 = vld [vmem:[#allocation5 + $0x158] sm:$0xff]
    %v1588 = vld [vmem:[#allocation5 + $0x160] sm:$0xff]
    %v1589 = vld [vmem:[#allocation5 + $0x168] sm:$0xff]
    %v1590 = vld [vmem:[#allocation5 + $0x170] sm:$0xff]
    %v1591 = vld [vmem:[#allocation5 + $0x178] sm:$0xff]
    %v1592 = vld [vmem:[#allocation5 + $0x180] sm:$0xff]
    %v1593 = vld [vmem:[#allocation5 + $0x188] sm:$0xff]
    %v1594 = vld [vmem:[#allocation5 + $0x190] sm:$0xff]
    %v1595 = vld [vmem:[#allocation5 + $0x198] sm:$0xff]
    %v1596 = vld [vmem:[#allocation5 + $0x1a0] sm:$0xff]
    %v1597 = vld [vmem:[#allocation5 + $0x1a8] sm:$0xff]
    %v1598 = vld [vmem:[#allocation5 + $0x1b0] sm:$0xff]
    %v1599 = vld [vmem:[#allocation5 + $0x1b8] sm:$0xff]
    %v1600 = vld [vmem:[#allocation5 + $0x1c0] sm:$0xff]
    %v1601 = vld [vmem:[#allocation5 + $0x1c8] sm:$0xff]
    %v1602 = vld [vmem:[#allocation5 + $0x1d0] sm:$0xff]
    %v1603 = vld [vmem:[#allocation5 + $0x1d8] sm:$0xff]
    %v1604 = vld [vmem:[#allocation5 + $0x1e0] sm:$0xff]
    %v1605 = vld [vmem:[#allocation5 + $0x1e8] sm:$0xff]
    %v1606 = vld [vmem:[#allocation5 + $0x1f0] sm:$0xff]
    %v1607 = vld [vmem:[#allocation5 + $0x1f8] sm:$0xff]
    %v1608 = vld [vmem:[#allocation5 + $0x200] sm:$0xff]
    %v1609 = vld [vmem:[#allocation5 + $0x208] sm:$0xff]
    %v1610 = vld [vmem:[#allocation5 + $0x210] sm:$0xff]
    %v1611 = vld [vmem:[#allocation5 + $0x218] sm:$0xff]
    %v1612 = vld [vmem:[#allocation5 + $0x220] sm:$0xff]
    %v1613 = vld [vmem:[#allocation5 + $0x228] sm:$0xff]
    %v1614 = vld [vmem:[#allocation5 + $0x230] sm:$0xff]
    %v1615 = vld [vmem:[#allocation5 + $0x238] sm:$0xff]
    %v1616 = vld [vmem:[#allocation5 + $0x240] sm:$0xff]
    %v1617 = vld [vmem:[#allocation5 + $0x248] sm:$0xff]
    %v1618 = vld [vmem:[#allocation5 + $0x250] sm:$0xff]
    %v1619 = vld [vmem:[#allocation5 + $0x258] sm:$0xff]
    %v1620 = vld [vmem:[#allocation5 + $0x260] sm:$0xff]
    %v1621 = vld [vmem:[#allocation5 + $0x268] sm:$0xff]
    %v1622 = vld [vmem:[#allocation5 + $0x270] sm:$0xff]
    %v1623 = vld [vmem:[#allocation5 + $0x278] sm:$0xff]
    %v1624 = vld [vmem:[#allocation5 + $0x280] sm:$0xff]
    %v1625 = vld [vmem:[#allocation5 + $0x288] sm:$0xff]
    %v1626 = vld [vmem:[#allocation5 + $0x290] sm:$0xff]
    %v1627 = vld [vmem:[#allocation5 + $0x298] sm:$0xff]
    %v1628 = vld [vmem:[#allocation5 + $0x2a0] sm:$0xff]
    %v1629 = vld [vmem:[#allocation5 + $0x2a8] sm:$0xff]
    %v1630 = vld [vmem:[#allocation5 + $0x2b0] sm:$0xff]
    %v1631 = vld [vmem:[#allocation5 + $0x2b8] sm:$0xff]
    %v1632 = vld [vmem:[#allocation5 + $0x2c0] sm:$0xff]
    %v1633 = vld [vmem:[#allocation5 + $0x2c8] sm:$0xff]
    %v1634 = vld [vmem:[#allocation5 + $0x2d0] sm:$0xff]
    %v1635 = vld [vmem:[#allocation5 + $0x2d8] sm:$0xff]
    %v1636 = vld [vmem:[#allocation5 + $0x2e0] sm:$0xff]
    %v1637 = vld [vmem:[#allocation5 + $0x2e8] sm:$0xff]
    %v1638 = vld [vmem:[#allocation5 + $0x2f0] sm:$0xff]
    %v1639 = vld [vmem:[#allocation5 + $0x2f8] sm:$0xff]
    %v1640 = vld [vmem:[%s4] sm:$0xff]
    %v1641 = vld [vmem:[%s4 + $0x8] sm:$0xf]
    %v1644 = vlaneseq
    %v1645 = vshrl.u32 %v1644, 7
    %v1646 = vsub.s32 0, %v1645
    %v1647 = vrot.slane %v1640, %v1646
    %v1648 = vlaneseq
    %v1649 = vshrl.u32 %v1648, 7
    %v1650 = vsub.s32 1, %v1649
    %v1651 = vrot.slane %v1640, %v1650
    %v1652 = vlaneseq
    %v1653 = vshrl.u32 %v1652, 7
    %v1654 = vsub.s32 2, %v1653
    %v1655 = vrot.slane %v1640, %v1654
    %v1656 = vlaneseq
    %v1657 = vshrl.u32 %v1656, 7
    %v1658 = vsub.s32 3, %v1657
    %v1659 = vrot.slane %v1640, %v1658
    %v1660 = vlaneseq
    %v1661 = vshrl.u32 %v1660, 7
    %v1662 = vsub.s32 4, %v1661
    %v1663 = vrot.slane %v1640, %v1662
    %v1664 = vlaneseq
    %v1665 = vshrl.u32 %v1664, 7
    %v1666 = vsub.s32 5, %v1665
    %v1667 = vrot.slane %v1640, %v1666
    %v1668 = vlaneseq
    %v1669 = vshrl.u32 %v1668, 7
    %v1670 = vsub.s32 6, %v1669
    %v1671 = vrot.slane %v1640, %v1670
    %v1672 = vlaneseq
    %v1673 = vshrl.u32 %v1672, 7
    %v1674 = vsub.s32 7, %v1673
    %v1675 = vrot.slane %v1640, %v1674
    %v1676 = vlaneseq
    %v1677 = vshrl.u32 %v1676, 7
    %v1678 = vsub.s32 0, %v1677
    %v1679 = vrot.slane %v1641, %v1678
    %v1680 = vlaneseq
    %v1681 = vshrl.u32 %v1680, 7
    %v1682 = vsub.s32 1, %v1681
    %v1683 = vrot.slane %v1641, %v1682
    %v1684 = vlaneseq
    %v1685 = vshrl.u32 %v1684, 7
    %v1686 = vsub.s32 2, %v1685
    %v1687 = vrot.slane %v1641, %v1686
    %v1688 = vlaneseq
    %v1689 = vshrl.u32 %v1688, 7
    %v1690 = vsub.s32 3, %v1689
    %v1691 = vrot.slane %v1641, %v1690
    %v1800 = vunpack.c.l.b16 %v1544
    %v1801 = vunpack.c.h.b16 %v1544
    %v1802 = vunpack.c.l.b16 %v1545
    %v1803 = vunpack.c.h.b16 %v1545
    %v1804 = vunpack.c.l.b16 %v1546
    %v1805 = vunpack.c.h.b16 %v1546
    %v1806 = vunpack.c.l.b16 %v1547
    %v1807 = vunpack.c.h.b16 %v1547
    %v1808 = vunpack.c.l.b16 %v1548
    %v1809 = vunpack.c.h.b16 %v1548
    %v1810 = vunpack.c.l.b16 %v1549
    %v1811 = vunpack.c.h.b16 %v1549
    %v1812 = vunpack.c.l.b16 %v1550
    %v1813 = vunpack.c.h.b16 %v1550
    %v1814 = vunpack.c.l.b16 %v1551
    %v1815 = vunpack.c.h.b16 %v1551
    %v1816 = vunpack.c.l.b16 %v1552
    %v1817 = vunpack.c.h.b16 %v1552
    %v1818 = vunpack.c.l.b16 %v1553
    %v1819 = vunpack.c.h.b16 %v1553
    %v1820 = vunpack.c.l.b16 %v1554
    %v1821 = vunpack.c.h.b16 %v1554
    %v1822 = vunpack.c.l.b16 %v1555
    %v1823 = vunpack.c.h.b16 %v1555
    %v1824 = vunpack.c.l.b16 %v1556
    %v1825 = vunpack.c.h.b16 %v1556
    %v1826 = vunpack.c.l.b16 %v1557
    %v1827 = vunpack.c.h.b16 %v1557
    %v1828 = vunpack.c.l.b16 %v1558
    %v1829 = vunpack.c.h.b16 %v1558
    %v1830 = vunpack.c.l.b16 %v1559
    %v1831 = vunpack.c.h.b16 %v1559
    %v1832 = vunpack.c.l.b16 %v1560
    %v1833 = vunpack.c.h.b16 %v1560
    %v1834 = vunpack.c.l.b16 %v1561
    %v1835 = vunpack.c.h.b16 %v1561
    %v1836 = vunpack.c.l.b16 %v1562
    %v1837 = vunpack.c.h.b16 %v1562
    %v1838 = vunpack.c.l.b16 %v1563
    %v1839 = vunpack.c.h.b16 %v1563
    %v1840 = vunpack.c.l.b16 %v1564
    %v1841 = vunpack.c.h.b16 %v1564
    %v1842 = vunpack.c.l.b16 %v1565
    %v1843 = vunpack.c.h.b16 %v1565
    %v1844 = vunpack.c.l.b16 %v1566
    %v1845 = vunpack.c.h.b16 %v1566
    %v1846 = vunpack.c.l.b16 %v1567
    %v1847 = vunpack.c.h.b16 %v1567
    %v1848 = vunpack.c.l.b16 %v1568
    %v1849 = vunpack.c.h.b16 %v1568
    %v1850 = vunpack.c.l.b16 %v1569
    %v1851 = vunpack.c.h.b16 %v1569
    %v1852 = vunpack.c.l.b16 %v1570
    %v1853 = vunpack.c.h.b16 %v1570
    %v1854 = vunpack.c.l.b16 %v1571
    %v1855 = vunpack.c.h.b16 %v1571
    %v1856 = vunpack.c.l.b16 %v1572
    %v1857 = vunpack.c.h.b16 %v1572
    %v1858 = vunpack.c.l.b16 %v1573
    %v1859 = vunpack.c.h.b16 %v1573
    %v1860 = vunpack.c.l.b16 %v1574
    %v1861 = vunpack.c.h.b16 %v1574
    %v1862 = vunpack.c.l.b16 %v1575
    %v1863 = vunpack.c.h.b16 %v1575
    %v1864 = vunpack.c.l.b16 %v1576
    %v1865 = vunpack.c.h.b16 %v1576
    %v1866 = vunpack.c.l.b16 %v1577
    %v1867 = vunpack.c.h.b16 %v1577
    %v1868 = vunpack.c.l.b16 %v1578
    %v1869 = vunpack.c.h.b16 %v1578
    %v1870 = vunpack.c.l.b16 %v1579
    %v1871 = vunpack.c.h.b16 %v1579
    %v1872 = vunpack.c.l.b16 %v1580
    %v1873 = vunpack.c.h.b16 %v1580
    %v1874 = vunpack.c.l.b16 %v1581
    %v1875 = vunpack.c.h.b16 %v1581
    %v1876 = vunpack.c.l.b16 %v1582
    %v1877 = vunpack.c.h.b16 %v1582
    %v1878 = vunpack.c.l.b16 %v1583
    %v1879 = vunpack.c.h.b16 %v1583
    %v1880 = vunpack.c.l.b16 %v1584
    %v1881 = vunpack.c.h.b16 %v1584
    %v1882 = vunpack.c.l.b16 %v1585
    %v1883 = vunpack.c.h.b16 %v1585
    %v1884 = vunpack.c.l.b16 %v1586
    %v1885 = vunpack.c.h.b16 %v1586
    %v1886 = vunpack.c.l.b16 %v1587
    %v1887 = vunpack.c.h.b16 %v1587
    %v1888 = vunpack.c.l.b16 %v1588
    %v1889 = vunpack.c.h.b16 %v1588
    %v1890 = vunpack.c.l.b16 %v1589
    %v1891 = vunpack.c.h.b16 %v1589
    %v1892 = vunpack.c.l.b16 %v1590
    %v1893 = vunpack.c.h.b16 %v1590
    %v1894 = vunpack.c.l.b16 %v1591
    %v1895 = vunpack.c.h.b16 %v1591
    %v1896 = vunpack.c.l.b16 %v1592
    %v1897 = vunpack.c.h.b16 %v1592
    %v1898 = vunpack.c.l.b16 %v1593
    %v1899 = vunpack.c.h.b16 %v1593
    %v1900 = vunpack.c.l.b16 %v1594
    %v1901 = vunpack.c.h.b16 %v1594
    %v1902 = vunpack.c.l.b16 %v1595
    %v1903 = vunpack.c.h.b16 %v1595
    %v1904 = vunpack.c.l.b16 %v1596
    %v1905 = vunpack.c.h.b16 %v1596
    %v1906 = vunpack.c.l.b16 %v1597
    %v1907 = vunpack.c.h.b16 %v1597
    %v1908 = vunpack.c.l.b16 %v1598
    %v1909 = vunpack.c.h.b16 %v1598
    %v1910 = vunpack.c.l.b16 %v1599
    %v1911 = vunpack.c.h.b16 %v1599
    %v1912 = vunpack.c.l.b16 %v1600
    %v1913 = vunpack.c.h.b16 %v1600
    %v1914 = vunpack.c.l.b16 %v1601
    %v1915 = vunpack.c.h.b16 %v1601
    %v1916 = vunpack.c.l.b16 %v1602
    %v1917 = vunpack.c.h.b16 %v1602
    %v1918 = vunpack.c.l.b16 %v1603
    %v1919 = vunpack.c.h.b16 %v1603
    %v1920 = vunpack.c.l.b16 %v1604
    %v1921 = vunpack.c.h.b16 %v1604
    %v1922 = vunpack.c.l.b16 %v1605
    %v1923 = vunpack.c.h.b16 %v1605
    %v1924 = vunpack.c.l.b16 %v1606
    %v1925 = vunpack.c.h.b16 %v1606
    %v1926 = vunpack.c.l.b16 %v1607
    %v1927 = vunpack.c.h.b16 %v1607
    %v1928 = vunpack.c.l.b16 %v1608
    %v1929 = vunpack.c.h.b16 %v1608
    %v1930 = vunpack.c.l.b16 %v1609
    %v1931 = vunpack.c.h.b16 %v1609
    %v1932 = vunpack.c.l.b16 %v1610
    %v1933 = vunpack.c.h.b16 %v1610
    %v1934 = vunpack.c.l.b16 %v1611
    %v1935 = vunpack.c.h.b16 %v1611
    %v1936 = vunpack.c.l.b16 %v1612
    %v1937 = vunpack.c.h.b16 %v1612
    %v1938 = vunpack.c.l.b16 %v1613
    %v1939 = vunpack.c.h.b16 %v1613
    %v1940 = vunpack.c.l.b16 %v1614
    %v1941 = vunpack.c.h.b16 %v1614
    %v1942 = vunpack.c.l.b16 %v1615
    %v1943 = vunpack.c.h.b16 %v1615
    %v1944 = vunpack.c.l.b16 %v1616
    %v1945 = vunpack.c.h.b16 %v1616
    %v1946 = vunpack.c.l.b16 %v1617
    %v1947 = vunpack.c.h.b16 %v1617
    %v1948 = vunpack.c.l.b16 %v1618
    %v1949 = vunpack.c.h.b16 %v1618
    %v1950 = vunpack.c.l.b16 %v1619
    %v1951 = vunpack.c.h.b16 %v1619
    %v1952 = vunpack.c.l.b16 %v1620
    %v1953 = vunpack.c.h.b16 %v1620
    %v1954 = vunpack.c.l.b16 %v1621
    %v1955 = vunpack.c.h.b16 %v1621
    %v1956 = vunpack.c.l.b16 %v1622
    %v1957 = vunpack.c.h.b16 %v1622
    %v1958 = vunpack.c.l.b16 %v1623
    %v1959 = vunpack.c.h.b16 %v1623
    %v1960 = vunpack.c.l.b16 %v1624
    %v1961 = vunpack.c.h.b16 %v1624
    %v1962 = vunpack.c.l.b16 %v1625
    %v1963 = vunpack.c.h.b16 %v1625
    %v1964 = vunpack.c.l.b16 %v1626
    %v1965 = vunpack.c.h.b16 %v1626
    %v1966 = vunpack.c.l.b16 %v1627
    %v1967 = vunpack.c.h.b16 %v1627
    %v1968 = vunpack.c.l.b16 %v1628
    %v1969 = vunpack.c.h.b16 %v1628
    %v1970 = vunpack.c.l.b16 %v1629
    %v1971 = vunpack.c.h.b16 %v1629
    %v1972 = vunpack.c.l.b16 %v1630
    %v1973 = vunpack.c.h.b16 %v1630
    %v1974 = vunpack.c.l.b16 %v1631
    %v1975 = vunpack.c.h.b16 %v1631
    %v1976 = vunpack.c.l.b16 %v1632
    %v1977 = vunpack.c.h.b16 %v1632
    %v1978 = vunpack.c.l.b16 %v1633
    %v1979 = vunpack.c.h.b16 %v1633
    %v1980 = vunpack.c.l.b16 %v1634
    %v1981 = vunpack.c.h.b16 %v1634
    %v1982 = vunpack.c.l.b16 %v1635
    %v1983 = vunpack.c.h.b16 %v1635
    %v1984 = vunpack.c.l.b16 %v1636
    %v1985 = vunpack.c.h.b16 %v1636
    %v1986 = vunpack.c.l.b16 %v1637
    %v1987 = vunpack.c.h.b16 %v1637
    %v1988 = vunpack.c.l.b16 %v1638
    %v1989 = vunpack.c.h.b16 %v1638
    %v1990 = vunpack.c.l.b16 %v1639
    %v1991 = vunpack.c.h.b16 %v1639
    %v1992 = vpack.c.b16 %v1812, %v1800
    %v1993 = vpack.c.b16 %v1813, %v1801
    %v1994 = vpack.c.b16 %v1814, %v1802
    %v1995 = vpack.c.b16 %v1815, %v1803
    %v1996 = vpack.c.b16 %v1816, %v1804
    %v1997 = vpack.c.b16 %v1817, %v1805
    %v1998 = vpack.c.b16 %v1818, %v1806
    %v1999 = vpack.c.b16 %v1819, %v1807
    %v2000 = vpack.c.b16 %v1820, %v1808
    %v2001 = vpack.c.b16 %v1821, %v1809
    %v2002 = vpack.c.b16 %v1822, %v1810
    %v2003 = vpack.c.b16 %v1823, %v1811
    %v2004 = vpack.c.b16 %v1836, %v1824
    %v2005 = vpack.c.b16 %v1837, %v1825
    %v2006 = vpack.c.b16 %v1838, %v1826
    %v2007 = vpack.c.b16 %v1839, %v1827
    %v2008 = vpack.c.b16 %v1840, %v1828
    %v2009 = vpack.c.b16 %v1841, %v1829
    %v2010 = vpack.c.b16 %v1842, %v1830
    %v2011 = vpack.c.b16 %v1843, %v1831
    %v2012 = vpack.c.b16 %v1844, %v1832
    %v2013 = vpack.c.b16 %v1845, %v1833
    %v2014 = vpack.c.b16 %v1846, %v1834
    %v2015 = vpack.c.b16 %v1847, %v1835
    %v2016 = vpack.c.b16 %v1860, %v1848
    %v2017 = vpack.c.b16 %v1861, %v1849
    %v2018 = vpack.c.b16 %v1862, %v1850
    %v2019 = vpack.c.b16 %v1863, %v1851
    %v2020 = vpack.c.b16 %v1864, %v1852
    %v2021 = vpack.c.b16 %v1865, %v1853
    %v2022 = vpack.c.b16 %v1866, %v1854
    %v2023 = vpack.c.b16 %v1867, %v1855
    %v2024 = vpack.c.b16 %v1868, %v1856
    %v2025 = vpack.c.b16 %v1869, %v1857
    %v2026 = vpack.c.b16 %v1870, %v1858
    %v2027 = vpack.c.b16 %v1871, %v1859
    %v2028 = vpack.c.b16 %v1884, %v1872
    %v2029 = vpack.c.b16 %v1885, %v1873
    %v2030 = vpack.c.b16 %v1886, %v1874
    %v2031 = vpack.c.b16 %v1887, %v1875
    %v2032 = vpack.c.b16 %v1888, %v1876
    %v2033 = vpack.c.b16 %v1889, %v1877
    %v2034 = vpack.c.b16 %v1890, %v1878
    %v2035 = vpack.c.b16 %v1891, %v1879
    %v2036 = vpack.c.b16 %v1892, %v1880
    %v2037 = vpack.c.b16 %v1893, %v1881
    %v2038 = vpack.c.b16 %v1894, %v1882
    %v2039 = vpack.c.b16 %v1895, %v1883
    %v2040 = vpack.c.b16 %v1908, %v1896
    %v2041 = vpack.c.b16 %v1909, %v1897
    %v2042 = vpack.c.b16 %v1910, %v1898
    %v2043 = vpack.c.b16 %v1911, %v1899
    %v2044 = vpack.c.b16 %v1912, %v1900
    %v2045 = vpack.c.b16 %v1913, %v1901
    %v2046 = vpack.c.b16 %v1914, %v1902
    %v2047 = vpack.c.b16 %v1915, %v1903
    %v2048 = vpack.c.b16 %v1916, %v1904
    %v2049 = vpack.c.b16 %v1917, %v1905
    %v2050 = vpack.c.b16 %v1918, %v1906
    %v2051 = vpack.c.b16 %v1919, %v1907
    %v2052 = vpack.c.b16 %v1932, %v1920
    %v2053 = vpack.c.b16 %v1933, %v1921
    %v2054 = vpack.c.b16 %v1934, %v1922
    %v2055 = vpack.c.b16 %v1935, %v1923
    %v2056 = vpack.c.b16 %v1936, %v1924
    %v2057 = vpack.c.b16 %v1937, %v1925
    %v2058 = vpack.c.b16 %v1938, %v1926
    %v2059 = vpack.c.b16 %v1939, %v1927
    %v2060 = vpack.c.b16 %v1940, %v1928
    %v2061 = vpack.c.b16 %v1941, %v1929
    %v2062 = vpack.c.b16 %v1942, %v1930
    %v2063 = vpack.c.b16 %v1943, %v1931
    %v2064 = vpack.c.b16 %v1956, %v1944
    %v2065 = vpack.c.b16 %v1957, %v1945
    %v2066 = vpack.c.b16 %v1958, %v1946
    %v2067 = vpack.c.b16 %v1959, %v1947
    %v2068 = vpack.c.b16 %v1960, %v1948
    %v2069 = vpack.c.b16 %v1961, %v1949
    %v2070 = vpack.c.b16 %v1962, %v1950
    %v2071 = vpack.c.b16 %v1963, %v1951
    %v2072 = vpack.c.b16 %v1964, %v1952
    %v2073 = vpack.c.b16 %v1965, %v1953
    %v2074 = vpack.c.b16 %v1966, %v1954
    %v2075 = vpack.c.b16 %v1967, %v1955
    %v2076 = vpack.c.b16 %v1980, %v1968
    %v2077 = vpack.c.b16 %v1981, %v1969
    %v2078 = vpack.c.b16 %v1982, %v1970
    %v2079 = vpack.c.b16 %v1983, %v1971
    %v2080 = vpack.c.b16 %v1984, %v1972
    %v2081 = vpack.c.b16 %v1985, %v1973
    %v2082 = vpack.c.b16 %v1986, %v1974
    %v2083 = vpack.c.b16 %v1987, %v1975
    %v2084 = vpack.c.b16 %v1988, %v1976
    %v2085 = vpack.c.b16 %v1989, %v1977
    %v2086 = vpack.c.b16 %v1990, %v1978
    %v2087 = vpack.c.b16 %v1991, %v1979
    %2184 = vmatprep.subr.bf16.mxu0 %v2077
    %2185 = vmatpush1.bf16.msra.mxu0 %v2076
    %2186 = vmatprep.subr.bf16.mxu0 %v2065
    %2187 = vmatpush1.bf16.msra.mxu0 %v2064
    %2188 = vmatprep.subr.bf16.mxu0 %v2053
    %2189 = vmatpush1.bf16.msra.mxu0 %v2052
    %2190 = vmatprep.subr.bf16.mxu0 %v2041
    %2191 = vmatpush1.bf16.msra.mxu0 %v2040
    %2192 = vmatprep.subr.bf16.mxu0 %v2029
    %2193 = vmatpush1.bf16.msra.mxu0 %v2028
    %2194 = vmatprep.subr.bf16.mxu0 %v2017
    %2195 = vmatpush1.bf16.msra.mxu0 %v2016
    %2196 = vmatprep.subr.bf16.mxu0 %v2005
    %2197 = vmatpush1.bf16.msra.mxu0 %v2004
    %2198 = vmatprep.subr.bf16.mxu0 %v1993
    %2199 = vmatpush1.bf16.msra.mxu0 %v1992
    %2200 = vmatprep.subr.bf16.mxu0 0
    %2201 = vmatpush2.bf16.msra.mxu0 0
    %2202 = vmatprep.subr.bf16.mxu0 0
    %2203 = vmatpush2.bf16.msra.mxu0 0
    %2204 = vmatprep.subr.bf16.mxu0 0
    %2205 = vmatpush2.bf16.msra.mxu0 0
    %2206 = vmatprep.subr.bf16.mxu0 0
    %2207 = vmatpush2.bf16.msra.mxu0 0
    %2208 = vmatprep.subr.bf16.mxu0 0
    %2209 = vmatpush2.bf16.msra.mxu0 0
    %2210 = vmatprep.subr.bf16.mxu0 0
    %2211 = vmatpush2.bf16.msra.mxu0 0
    %2212 = vmatprep.subr.bf16.mxu0 0
    %2213 = vmatpush2.bf16.msra.mxu0 0
    %2214 = vmatprep.subr.bf16.mxu0 0
    %2215 = vmatpush2.bf16.msra.mxu0 0
    %2216 = vmatprep.mubr.bf16.mxu0 0
    %2217 = vmatmul.mubr.bf16.gmra.mxu0 %v1543
    %v2218 = vpop.f32.mrf.mxu0
    %v2219 = vadd.f32 %v1647, %v2218
    %v2220 = vpop.f32.mrf.mxu0
    %v2221 = vadd.f32 %v1651, %v2220
    %v2222 = vpop.f32.mrf.mxu0
    %v2223 = vpop.f32.mrf.mxu0
    %2224 = vdwg.mxu0
    %2225 = vmatprep.subr.bf16.mxu0 %v2079
    %2226 = vmatpush1.bf16.msra.mxu0 %v2078
    %2227 = vmatprep.subr.bf16.mxu0 %v2067
    %2228 = vmatpush1.bf16.msra.mxu0 %v2066
    %2229 = vmatprep.subr.bf16.mxu0 %v2055
    %2230 = vmatpush1.bf16.msra.mxu0 %v2054
    %2231 = vmatprep.subr.bf16.mxu0 %v2043
    %2232 = vmatpush1.bf16.msra.mxu0 %v2042
    %2233 = vmatprep.subr.bf16.mxu0 %v2031
    %2234 = vmatpush1.bf16.msra.mxu0 %v2030
    %2235 = vmatprep.subr.bf16.mxu0 %v2019
    %2236 = vmatpush1.bf16.msra.mxu0 %v2018
    %2237 = vmatprep.subr.bf16.mxu0 %v2007
    %2238 = vmatpush1.bf16.msra.mxu0 %v2006
    %2239 = vmatprep.subr.bf16.mxu0 %v1995
    %2240 = vmatpush1.bf16.msra.mxu0 %v1994
    %2241 = vmatprep.subr.bf16.mxu0 0
    %2242 = vmatpush2.bf16.msra.mxu0 0
    %2243 = vmatprep.subr.bf16.mxu0 0
    %2244 = vmatpush2.bf16.msra.mxu0 0
    %2245 = vmatprep.subr.bf16.mxu0 0
    %2246 = vmatpush2.bf16.msra.mxu0 0
    %2247 = vmatprep.subr.bf16.mxu0 0
    %2248 = vmatpush2.bf16.msra.mxu0 0
    %2249 = vmatprep.subr.bf16.mxu0 0
    %2250 = vmatpush2.bf16.msra.mxu0 0
    %2251 = vmatprep.subr.bf16.mxu0 0
    %2252 = vmatpush2.bf16.msra.mxu0 0
    %2253 = vmatprep.subr.bf16.mxu0 0
    %2254 = vmatpush2.bf16.msra.mxu0 0
    %2255 = vmatprep.subr.bf16.mxu0 0
    %2256 = vmatpush2.bf16.msra.mxu0 0
    %2257 = vmatprep.mubr.bf16.mxu0 0
    %2258 = vmatmul.mubr.bf16.gmra.mxu0 %v1543
    %v2259 = vpop.f32.mrf.mxu0
    %v2260 = vadd.f32 %v1655, %v2259
    %v2261 = vpop.f32.mrf.mxu0
    %v2262 = vadd.f32 %v1659, %v2261
    %v2263 = vpop.f32.mrf.mxu0
    %v2264 = vpop.f32.mrf.mxu0
    %2265 = vdwg.mxu0
    %2266 = vmatprep.subr.bf16.mxu0 %v2081
    %2267 = vmatpush1.bf16.msra.mxu0 %v2080
    %2268 = vmatprep.subr.bf16.mxu0 %v2069
    %2269 = vmatpush1.bf16.msra.mxu0 %v2068
    %2270 = vmatprep.subr.bf16.mxu0 %v2057
    %2271 = vmatpush1.bf16.msra.mxu0 %v2056
    %2272 = vmatprep.subr.bf16.mxu0 %v2045
    %2273 = vmatpush1.bf16.msra.mxu0 %v2044
    %2274 = vmatprep.subr.bf16.mxu0 %v2033
    %2275 = vmatpush1.bf16.msra.mxu0 %v2032
    %2276 = vmatprep.subr.bf16.mxu0 %v2021
    %2277 = vmatpush1.bf16.msra.mxu0 %v2020
    %2278 = vmatprep.subr.bf16.mxu0 %v2009
    %2279 = vmatpush1.bf16.msra.mxu0 %v2008
    %2280 = vmatprep.subr.bf16.mxu0 %v1997
    %2281 = vmatpush1.bf16.msra.mxu0 %v1996
    %2282 = vmatprep.subr.bf16.mxu0 0
    %2283 = vmatpush2.bf16.msra.mxu0 0
    %2284 = vmatprep.subr.bf16.mxu0 0
    %2285 = vmatpush2.bf16.msra.mxu0 0
    %2286 = vmatprep.subr.bf16.mxu0 0
    %2287 = vmatpush2.bf16.msra.mxu0 0
    %2288 = vmatprep.subr.bf16.mxu0 0
    %2289 = vmatpush2.bf16.msra.mxu0 0
    %2290 = vmatprep.subr.bf16.mxu0 0
    %2291 = vmatpush2.bf16.msra.mxu0 0
    %2292 = vmatprep.subr.bf16.mxu0 0
    %2293 = vmatpush2.bf16.msra.mxu0 0
    %2294 = vmatprep.subr.bf16.mxu0 0
    %2295 = vmatpush2.bf16.msra.mxu0 0
    %2296 = vmatprep.subr.bf16.mxu0 0
    %2297 = vmatpush2.bf16.msra.mxu0 0
    %2298 = vmatprep.mubr.bf16.mxu0 0
    %2299 = vmatmul.mubr.bf16.gmra.mxu0 %v1543
    %v2300 = vpop.f32.mrf.mxu0
    %v2301 = vadd.f32 %v1663, %v2300
    %v2302 = vpop.f32.mrf.mxu0
    %v2303 = vadd.f32 %v1667, %v2302
    %v2304 = vpop.f32.mrf.mxu0
    %v2305 = vpop.f32.mrf.mxu0
    %2306 = vdwg.mxu0
    %2307 = vmatprep.subr.bf16.mxu0 %v2083
    %2308 = vmatpush1.bf16.msra.mxu0 %v2082
    %2309 = vmatprep.subr.bf16.mxu0 %v2071
    %2310 = vmatpush1.bf16.msra.mxu0 %v2070
    %2311 = vmatprep.subr.bf16.mxu0 %v2059
    %2312 = vmatpush1.bf16.msra.mxu0 %v2058
    %2313 = vmatprep.subr.bf16.mxu0 %v2047
    %2314 = vmatpush1.bf16.msra.mxu0 %v2046
    %2315 = vmatprep.subr.bf16.mxu0 %v2035
    %2316 = vmatpush1.bf16.msra.mxu0 %v2034
    %2317 = vmatprep.subr.bf16.mxu0 %v2023
    %2318 = vmatpush1.bf16.msra.mxu0 %v2022
    %2319 = vmatprep.subr.bf16.mxu0 %v2011
    %2320 = vmatpush1.bf16.msra.mxu0 %v2010
    %2321 = vmatprep.subr.bf16.mxu0 %v1999
    %2322 = vmatpush1.bf16.msra.mxu0 %v1998
    %2323 = vmatprep.subr.bf16.mxu0 0
    %2324 = vmatpush2.bf16.msra.mxu0 0
    %2325 = vmatprep.subr.bf16.mxu0 0
    %2326 = vmatpush2.bf16.msra.mxu0 0
    %2327 = vmatprep.subr.bf16.mxu0 0
    %2328 = vmatpush2.bf16.msra.mxu0 0
    %2329 = vmatprep.subr.bf16.mxu0 0
    %2330 = vmatpush2.bf16.msra.mxu0 0
    %2331 = vmatprep.subr.bf16.mxu0 0
    %2332 = vmatpush2.bf16.msra.mxu0 0
    %2333 = vmatprep.subr.bf16.mxu0 0
    %2334 = vmatpush2.bf16.msra.mxu0 0
    %2335 = vmatprep.subr.bf16.mxu0 0
    %2336 = vmatpush2.bf16.msra.mxu0 0
    %2337 = vmatprep.subr.bf16.mxu0 0
    %2338 = vmatpush2.bf16.msra.mxu0 0
    %2339 = vmatprep.mubr.bf16.mxu0 0
    %2340 = vmatmul.mubr.bf16.gmra.mxu0 %v1543
    %v2341 = vpop.f32.mrf.mxu0
    %v2342 = vadd.f32 %v1671, %v2341
    %v2343 = vpop.f32.mrf.mxu0
    %v2344 = vadd.f32 %v1675, %v2343
    %v2345 = vpop.f32.mrf.mxu0
    %v2346 = vpop.f32.mrf.mxu0
    %2347 = vdwg.mxu0
    %2348 = vmatprep.subr.bf16.mxu0 %v2085
    %2349 = vmatpush1.bf16.msra.mxu0 %v2084
    %2350 = vmatprep.subr.bf16.mxu0 %v2073
    %2351 = vmatpush1.bf16.msra.mxu0 %v2072
    %2352 = vmatprep.subr.bf16.mxu0 %v2061
    %2353 = vmatpush1.bf16.msra.mxu0 %v2060
    %2354 = vmatprep.subr.bf16.mxu0 %v2049
    %2355 = vmatpush1.bf16.msra.mxu0 %v2048
    %2356 = vmatprep.subr.bf16.mxu0 %v2037
    %2357 = vmatpush1.bf16.msra.mxu0 %v2036
    %2358 = vmatprep.subr.bf16.mxu0 %v2025
    %2359 = vmatpush1.bf16.msra.mxu0 %v2024
    %2360 = vmatprep.subr.bf16.mxu0 %v2013
    %2361 = vmatpush1.bf16.msra.mxu0 %v2012
    %2362 = vmatprep.subr.bf16.mxu0 %v2001
    %2363 = vmatpush1.bf16.msra.mxu0 %v2000
    %2364 = vmatprep.subr.bf16.mxu0 0
    %2365 = vmatpush2.bf16.msra.mxu0 0
    %2366 = vmatprep.subr.bf16.mxu0 0
    %2367 = vmatpush2.bf16.msra.mxu0 0
    %2368 = vmatprep.subr.bf16.mxu0 0
    %2369 = vmatpush2.bf16.msra.mxu0 0
    %2370 = vmatprep.subr.bf16.mxu0 0
    %2371 = vmatpush2.bf16.msra.mxu0 0
    %2372 = vmatprep.subr.bf16.mxu0 0
    %2373 = vmatpush2.bf16.msra.mxu0 0
    %2374 = vmatprep.subr.bf16.mxu0 0
    %2375 = vmatpush2.bf16.msra.mxu0 0
    %2376 = vmatprep.subr.bf16.mxu0 0
    %2377 = vmatpush2.bf16.msra.mxu0 0
    %2378 = vmatprep.subr.bf16.mxu0 0
    %2379 = vmatpush2.bf16.msra.mxu0 0
    %2380 = vmatprep.mubr.bf16.mxu0 0
    %2381 = vmatmul.mubr.bf16.gmra.mxu0 %v1543
    %v2382 = vpop.f32.mrf.mxu0
    %v2383 = vadd.f32 %v1679, %v2382
    %v2384 = vpop.f32.mrf.mxu0
    %v2385 = vadd.f32 %v1683, %v2384
    %v2386 = vpop.f32.mrf.mxu0
    %v2387 = vpop.f32.mrf.mxu0
    %2388 = vdwg.mxu0
    %2389 = vmatprep.subr.bf16.mxu0 %v2087
    %2390 = vmatpush1.bf16.msra.mxu0 %v2086
    %2391 = vmatprep.subr.bf16.mxu0 %v2075
    %2392 = vmatpush1.bf16.msra.mxu0 %v2074
    %2393 = vmatprep.subr.bf16.mxu0 %v2063
    %2394 = vmatpush1.bf16.msra.mxu0 %v2062
    %2395 = vmatprep.subr.bf16.mxu0 %v2051
    %2396 = vmatpush1.bf16.msra.mxu0 %v2050
    %2397 = vmatprep.subr.bf16.mxu0 %v2039
    %2398 = vmatpush1.bf16.msra.mxu0 %v2038
    %2399 = vmatprep.subr.bf16.mxu0 %v2027
    %2400 = vmatpush1.bf16.msra.mxu0 %v2026
    %2401 = vmatprep.subr.bf16.mxu0 %v2015
    %2402 = vmatpush1.bf16.msra.mxu0 %v2014
    %2403 = vmatprep.subr.bf16.mxu0 %v2003
    %2404 = vmatpush1.bf16.msra.mxu0 %v2002
    %2405 = vmatprep.subr.bf16.mxu0 0
    %2406 = vmatpush2.bf16.msra.mxu0 0
    %2407 = vmatprep.subr.bf16.mxu0 0
    %2408 = vmatpush2.bf16.msra.mxu0 0
    %2409 = vmatprep.subr.bf16.mxu0 0
    %2410 = vmatpush2.bf16.msra.mxu0 0
    %2411 = vmatprep.subr.bf16.mxu0 0
    %2412 = vmatpush2.bf16.msra.mxu0 0
    %2413 = vmatprep.subr.bf16.mxu0 0
    %2414 = vmatpush2.bf16.msra.mxu0 0
    %2415 = vmatprep.subr.bf16.mxu0 0
    %2416 = vmatpush2.bf16.msra.mxu0 0
    %2417 = vmatprep.subr.bf16.mxu0 0
    %2418 = vmatpush2.bf16.msra.mxu0 0
    %2419 = vmatprep.subr.bf16.mxu0 0
    %2420 = vmatpush2.bf16.msra.mxu0 0
    %2421 = vmatprep.mubr.bf16.mxu0 0
    %2422 = vmatmul.mubr.bf16.gmra.mxu0 %v1543
    %v2423 = vpop.f32.mrf.mxu0
    %v2424 = vadd.f32 %v1687, %v2423
    %v2425 = vpop.f32.mrf.mxu0
    %v2426 = vadd.f32 %v1691, %v2425
    %v2427 = vpop.f32.mrf.mxu0
    %v2428 = vpop.f32.mrf.mxu0
    %2429 = vdwg.mxu0
    %2430 = vst [vmem:[%s7 + $0x20] sm:$0xff] %v2219
    %2431 = vst [vmem:[%s7 + $0x28] sm:$0xff] %v2221
    %2432 = vst [vmem:[%s7 + $0x30] sm:$0xff] %v2260
    %2433 = vst [vmem:[%s7 + $0x38] sm:$0xff] %v2262
    %2434 = vst [vmem:[%s7 + $0x40] sm:$0xff] %v2301
    %2435 = vst [vmem:[%s7 + $0x48] sm:$0xff] %v2303
    %2436 = vst [vmem:[%s7 + $0x50] sm:$0xff] %v2342
    %2437 = vst [vmem:[%s7 + $0x58] sm:$0xff] %v2344
    %2438 = vst [vmem:[%s7 + $0x60] sm:$0xff] %v2383
    %2439 = vst [vmem:[%s7 + $0x68] sm:$0xff] %v2385
    %2440 = vst [vmem:[%s7 + $0x70] sm:$0xff] %v2424
    %2441 = vst [vmem:[%s7 + $0x78] sm:$0xff] %v2426
    // Predicated region
    $region38: #{model_forward.3} parent=1 // pred_check
      _
    $region39: #{model_forward.3} parent=1 // pred_check_branch
      %2443 = sbr.rel (0) target = $region41
    $region40: #{model_forward.3} parent=1 // pred_region
      _
    $region41: #{model_forward.3} parent=1 // pred_fallthru
      _
    // Predicated region
    $region42: #{model_forward.3} parent=1 // pred_check
      _
    $region43: #{model_forward.3} parent=1 // pred_check_branch
      %2445 = sbr.rel (0) target = $region45
    $region44: #{model_forward.3} parent=1 // pred_region
      _
    $region45: #{model_forward.3} parent=1 // pred_fallthru
      _
    %2446 = vsyncpa [#allocation4], 1
    %2447 = vsyncpa [#allocation6], 1

</llo_original>
